<compile_context>
chip_gen: v7x
topology: tpu7x:2x2x1
jax: 0.10.0
libtpu: 0.0.40
codegen_flags: <defaults>
</compile_context>

<pallas_src>
import functools

import jax
import jax.numpy as jnp
from jax.experimental import pallas as pl
from jax.experimental.pallas import tpu as pltpu


def _pick_tb(batch, n):
    """Largest divisor of `batch` such that TB*N stays near 128 MXU rows."""
    target = max(1, 128 // max(n, 1))
    tb = 1
    for cand in range(1, batch + 1):
        if batch % cand == 0 and cand <= target:
            tb = cand
    return tb


def _agcn_kernel(TB, N, EMB, DIN, DOUT,
                 x_ref, td_ref, tw_ref,
                 ahat_ref, ag_ref, e_ref, eexp_ref, biasn_ref,
                 wcat_ref, fc1w_ref, fc1b_ref, fc2w_ref, fc2b_ref,
                 fc3w_ref, fc3b_ref, wdg_ref, ab_ref, out_ref):
    f32 = jnp.float32
    bf16 = jnp.bfloat16
    L = EMB * DOUT
    R = TB * N

    x3 = x_ref[...]            # (TB, N, DIN)  bf16
    td3 = td_ref[...]          # (TB, N, EMB)  f32
    tw3 = tw_ref[...]          # (TB, N, EMB)  f32
    A = ahat_ref[...]          # (N, N)        bf16  (A_hat == AS, precomputed)
    AG = ag_ref[...]           # (N, N)        bf16  (normalized Laplacian)
    E = e_ref[...]             # (N, EMB)      f32

    # --- static-graph convs, per batch element (A_hat is symmetric) ---
    A_b = jnp.broadcast_to(A[None], (TB, N, N))
    AG_b = jnp.broadcast_to(AG[None], (TB, N, N))
    ho3 = jnp.einsum('bnm,bmi->bni', A_b, x3, preferred_element_type=f32)
    xag2_3 = jnp.einsum('bnm,bmi->bni', AG_b, x3, preferred_element_type=f32)

    # --- sgcn MLP on flattened (TB*N, .) rows ---
    ho = ho3.reshape(R, DIN)
    h1 = jax.nn.sigmoid(jnp.dot(ho.astype(bf16), fc1w_ref[...],
                                preferred_element_type=f32) + fc1b_ref[...])
    h2 = jax.nn.sigmoid(jnp.dot(h1.astype(bf16), fc2w_ref[...],
                                preferred_element_type=f32) + fc2b_ref[...])
    DF = jnp.dot(h2.astype(bf16), fc3w_ref[...],
                 preferred_element_type=f32) + fc3b_ref[...]          # (R, EMB)

    # --- dynamic node embeddings / dynamic adjacency (use_day and use_week) ---
    DF3 = DF.reshape(TB, N, EMB)
    DE3 = jnp.tanh(3.0 * (E[None] * td3 * tw3) * DF3)                 # (TB, N, EMB)
    DEb = DE3.astype(bf16)
    DA3 = jnp.maximum(
        jnp.tanh(3.0 * jnp.einsum('bnd,bmd->bnm', DEb, DEb,
                                  preferred_element_type=f32)), 0.0)  # (TB, N, N)

    # --- dynamic graph conv ---
    xdg3 = jnp.einsum('bnm,bmi->bni', DA3.astype(bf16), x3,
                      preferred_element_type=f32)                     # (TB, N, DIN)
    x_dgconv = jnp.dot(xdg3.reshape(R, DIN).astype(bf16), wdg_ref[...],
                       preferred_element_type=f32)                    # (R, DOUT)

    # --- adaptive (pooled-weight) graph conv: fused cheb_k==2 supports [I, AG] ---
    xcat = jnp.concatenate(
        [x3.reshape(R, DIN), xag2_3.reshape(R, DIN).astype(bf16)], axis=-1)
    z = jnp.dot(xcat, wcat_ref[...], preferred_element_type=f32)      # (R, EMB*DOUT)

    # contract over the EMB groups of DOUT lanes:
    #   x_agconv[r, o] = sum_d E[n, d] * z[r, d*DOUT + o]
    e_exp = jnp.broadcast_to(eexp_ref[...][None], (TB, N, L)).reshape(R, L)
    acc = z * e_exp
    if EMB > 1 and (EMB & (EMB - 1)) == 0:
        # log2(EMB)-step shift-add tree on the lane axis (XLU rotations).
        shift = (EMB // 2) * DOUT
        while shift >= DOUT:
            acc = acc + pltpu.roll(acc, shift, axis=1)
            shift //= 2
        red = acc[:, :DOUT]
    else:
        red = jnp.zeros((R, DOUT), f32)
        for d in range(EMB):
            red = red + acc[:, d * DOUT:(d + 1) * DOUT]

    bias = jnp.broadcast_to(biasn_ref[...][None], (TB, N, DOUT)).reshape(R, DOUT)
    x_agconv = red + bias

    a = ab_ref[0]   # SMEM scalars
    b = ab_ref[1]
    out = a * x_agconv + b * x_dgconv                                 # (R, DOUT)
    out_ref[...] = out.reshape(TB, N, DOUT).astype(out_ref.dtype)


def agcn_forward(x, E_id_emb, T_D_emb, T_W_emb, params):
    B, N, DIN = x.shape
    EMB = E_id_emb.shape[1]
    DOUT = params["bias_pool"].shape[1]
    K = params["weights_pool"].shape[1]
    assert K == 2, "kernel assumes cheb_k == 2 (stack of [I@x, AG@x])"

    f32, bf16 = jnp.float32, jnp.bfloat16
    E = E_id_emb.astype(f32)

    # ---- batch-invariant graph construction, hoisted out of the kernel ----
    EEt = E @ E.T
    A = jnp.maximum(jnp.tanh(3.0 * EEt), 0.0)            # AS == A_hat (alpha1 == alpha2)
    dinv = jax.lax.rsqrt(jnp.sum(A, axis=-1))            # row degree^-1/2 (matches ref)
    AG = dinv[:, None] * A * dinv[None, :]
    bias_n = E @ params["bias_pool"].astype(f32)         # (N, DOUT)
    # (EMB, K, DIN, DOUT) -> (K*DIN, EMB*DOUT); row order matches concat([x, AG@x]).
    wcat = jnp.transpose(params["weights_pool"], (1, 2, 0, 3)).reshape(K * DIN, EMB * DOUT)
    e_exp = jnp.repeat(E, DOUT, axis=1)                  # (N, EMB*DOUT), e_exp[n, d*DOUT+o] = E[n, d]
    ab = jnp.stack([params["a"].reshape(()), params["b"].reshape(())]).astype(f32)

    TB = _pick_tb(B, N)
    grid = (B // TB,)
    kernel = functools.partial(_agcn_kernel, TB, N, EMB, DIN, DOUT)

    def batched(d2):
        return pl.BlockSpec((TB, N, d2), lambda g: (g, 0, 0))

    def shared(d1, d2):
        return pl.BlockSpec((d1, d2), lambda g: (0, 0))

    in_specs = [
        batched(DIN),                      # x              (bf16)
        batched(EMB),                      # T_D_emb        (f32)
        batched(EMB),                      # T_W_emb        (f32)
        shared(N, N),                      # A_hat          (bf16)
        shared(N, N),                      # AG             (bf16)
        shared(N, EMB),                    # E              (f32)
        shared(N, EMB * DOUT),             # E expanded     (f32)
        shared(N, DOUT),                   # E @ bias_pool  (f32)
        shared(K * DIN, EMB * DOUT),       # stacked weights_pool (bf16)
        shared(DIN, DIN), shared(1, DIN),  # sgcn fc1
        shared(DIN, EMB), shared(1, EMB),  # sgcn fc2
        shared(EMB, EMB), shared(1, EMB),  # sgcn fc3
        shared(DIN, DOUT),                 # Wdg            (bf16)
        pl.BlockSpec(memory_space=pltpu.MemorySpace.SMEM),   # [a, b] scalars
    ]
    out_specs = pl.BlockSpec((TB, N, DOUT), lambda g: (g, 0, 0))

    return pl.pallas_call(
        kernel,
        out_shape=jax.ShapeDtypeStruct((B, N, DOUT), f32),
        grid_spec=pltpu.PrefetchScalarGridSpec(
            num_scalar_prefetch=0,
            grid=grid,
            in_specs=in_specs,
            out_specs=out_specs,
        ),
        compiler_params=pltpu.CompilerParams(
            dimension_semantics=("parallel",),
            vmem_limit_bytes=32 * 1024 * 1024,
        ),
    )(x.astype(bf16), T_D_emb.astype(f32), T_W_emb.astype(f32),
      A.astype(bf16), AG.astype(bf16), E, e_exp, bias_n, wcat.astype(bf16),
      params["fc1_w"].astype(bf16), params["fc1_b"].astype(f32),
      params["fc2_w"].astype(bf16), params["fc2_b"].astype(f32),
      params["fc3_w"].astype(bf16), params["fc3_b"].astype(f32),
      params["Wdg"].astype(bf16), ab)


def agcn_reference(x, E, td, tw, p):
    """Pure-JAX (f32) transcription of the PyTorch forward (for verification)."""
    N = E.shape[0]
    I = jnp.eye(N, dtype=x.dtype)
    EEt = E @ E.T
    AS = jax.nn.relu(jnp.tanh(3.0 * EEt))
    Dm = jnp.diag(jnp.sum(AS, axis=-1) ** (-0.5))
    AG = Dm @ AS @ Dm
    A_hat = jax.nn.relu(jnp.tanh(3.0 * EEt))
    Et = E[None] * td * tw
    ho = jnp.einsum('bvc,vw->bwc', x, A_hat)
    h1 = jax.nn.sigmoid(ho @ p['fc1_w'] + p['fc1_b'])
    h2 = jax.nn.sigmoid(h1 @ p['fc2_w'] + p['fc2_b'])
    DF = h2 @ p['fc3_w'] + p['fc3_b']
    DE = jnp.tanh(3.0 * Et * DF)
    DA = jax.nn.relu(jnp.tanh(3.0 * jnp.einsum('bnd,bmd->bnm', DE, DE)))
    x_ag1 = jnp.einsum('nm,bmi->bni', I, x)
    x_ag2 = jnp.einsum('nm,bmi->bni', AG, x)
    x_ag = jnp.stack([x_ag1, x_ag2], axis=1)
    weights = jnp.einsum('nd,dkio->nkio', E, p['weights_pool'])
    bias = E @ p['bias_pool']
    x_ag = jnp.transpose(x_ag, (0, 2, 1, 3))
    x_agconv = jnp.einsum('bnki,nkio->bno', x_ag, weights) + bias
    x_dg2 = jnp.einsum('bnm,bmi->bni', DA, x)
    x_dgconv = jnp.einsum('bni,io->bno', x_dg2, p['Wdg'])
    return p['a'] * x_agconv + p['b'] * x_dgconv


if __name__ == "__main__":
    B, N, DIN, DOUT, EMB, K = 2, 16, 8, 8, 16, 2
    key = jax.random.PRNGKey(0)
    ks = jax.random.split(key, 16)

    def xavier(k, shape):
        fan_in, fan_out = shape[-2], shape[-1]
        std = (2.0 / (fan_in + fan_out)) ** 0.5
        return std * jax.random.normal(k, shape, jnp.float32)

    params = {
        "weights_pool": xavier(ks[0], (EMB, K, DIN, DOUT)),
        "bias_pool": xavier(ks[1], (EMB, DOUT)),
        "Wdg": xavier(ks[2], (DIN, DOUT)),
        "a": jax.random.uniform(ks[3], (1, 1), jnp.float32),
        "b": jax.random.uniform(ks[4], (1, 1), jnp.float32),
        "fc1_w": xavier(ks[5], (DIN, DIN)),
        "fc1_b": 0.1 * jax.random.normal(ks[6], (1, DIN), jnp.float32),
        "fc2_w": xavier(ks[7], (DIN, EMB)),
        "fc2_b": 0.1 * jax.random.normal(ks[8], (1, EMB), jnp.float32),
        "fc3_w": xavier(ks[9], (EMB, EMB)),
        "fc3_b": 0.1 * jax.random.normal(ks[10], (1, EMB), jnp.float32),
    }

    x = 0.5 * jax.random.normal(ks[11], (B, N, DIN), jnp.float32)
    E_id_emb = 0.3 * jax.random.normal(ks[12], (N, EMB), jnp.float32)
    T_D_emb = 0.5 * jax.random.normal(ks[13], (B, N, EMB), jnp.float32)
    T_W_emb = 0.5 * jax.random.normal(ks[14], (B, N, EMB), jnp.float32)

    out = agcn_forward(x, E_id_emb, T_D_emb, T_W_emb, params)
    out = jax.block_until_ready(out)

    ref = agcn_reference(x, E_id_emb, T_D_emb, T_W_emb, params)
    assert out.shape == (B, N, DOUT)
    assert bool(jnp.all(jnp.isfinite(out))), "non-finite output"
    abs_err = float(jnp.max(jnp.abs(out - ref)))
    scale = float(jnp.max(jnp.abs(ref))) + 1e-6
    # bf16 MXU operands (f32 accumulation) vs. an all-f32 reference: allow 3% of
    # the output dynamic range; observed error is typically well under 1%.
    assert abs_err / scale < 3e-2, f"mismatch vs reference: max abs err {abs_err} (scale {scale})"
    print("KERNEL_OK")
</pallas_src>

<mosaic_0001>
module attributes {stable_mosaic.version = 11 : i64} {
  func.func @_agcn_kernel(%arg0: i32, %arg1: memref<2x16x8xbf16, #tpu.memory_space<vmem>>, %arg2: memref<2x16x16xf32, #tpu.memory_space<vmem>>, %arg3: memref<2x16x16xf32, #tpu.memory_space<vmem>>, %arg4: memref<16x16xbf16, #tpu.memory_space<vmem>>, %arg5: memref<16x16xbf16, #tpu.memory_space<vmem>>, %arg6: memref<16x16xf32, #tpu.memory_space<vmem>>, %arg7: memref<16x128xf32, #tpu.memory_space<vmem>>, %arg8: memref<16x8xf32, #tpu.memory_space<vmem>>, %arg9: memref<16x128xbf16, #tpu.memory_space<vmem>>, %arg10: memref<8x8xbf16, #tpu.memory_space<vmem>>, %arg11: memref<1x8xf32, #tpu.memory_space<vmem>>, %arg12: memref<8x16xbf16, #tpu.memory_space<vmem>>, %arg13: memref<1x16xf32, #tpu.memory_space<vmem>>, %arg14: memref<16x16xbf16, #tpu.memory_space<vmem>>, %arg15: memref<1x16xf32, #tpu.memory_space<vmem>>, %arg16: memref<8x8xbf16, #tpu.memory_space<vmem>>, %arg17: memref<2xf32, #tpu.memory_space<smem>>, %arg18: memref<2x16x8xf32, #tpu.memory_space<vmem>>) attributes {dimension_semantics = [#tpu.dimension_semantics<parallel>], iteration_bounds = array<i64: 1>, scalar_prefetch = 0 : i64, scratch_operands = 0 : i64, tpu.core_type = #tpu.core_type<tc>, window_params = [{transform_indices = @transform_0, window_bounds = array<i64: 2, 16, 8>}, {transform_indices = @transform_1, window_bounds = array<i64: 2, 16, 16>}, {transform_indices = @transform_2, window_bounds = array<i64: 2, 16, 16>}, {pipeline_mode = #tpu.pipeline_mode<synchronous>, transform_indices = @transform_3, window_bounds = array<i64: 16, 16>}, {pipeline_mode = #tpu.pipeline_mode<synchronous>, transform_indices = @transform_4, window_bounds = array<i64: 16, 16>}, {pipeline_mode = #tpu.pipeline_mode<synchronous>, transform_indices = @transform_5, window_bounds = array<i64: 16, 16>}, {pipeline_mode = #tpu.pipeline_mode<synchronous>, transform_indices = @transform_6, window_bounds = array<i64: 16, 128>}, {pipeline_mode = #tpu.pipeline_mode<synchronous>, transform_indices = @transform_7, window_bounds = array<i64: 16, 8>}, {pipeline_mode = #tpu.pipeline_mode<synchronous>, transform_indices = @transform_8, window_bounds = array<i64: 16, 128>}, {pipeline_mode = #tpu.pipeline_mode<synchronous>, transform_indices = @transform_9, window_bounds = array<i64: 8, 8>}, {pipeline_mode = #tpu.pipeline_mode<synchronous>, transform_indices = @transform_10, window_bounds = array<i64: 1, 8>}, {pipeline_mode = #tpu.pipeline_mode<synchronous>, transform_indices = @transform_11, window_bounds = array<i64: 8, 16>}, {pipeline_mode = #tpu.pipeline_mode<synchronous>, transform_indices = @transform_12, window_bounds = array<i64: 1, 16>}, {pipeline_mode = #tpu.pipeline_mode<synchronous>, transform_indices = @transform_13, window_bounds = array<i64: 16, 16>}, {pipeline_mode = #tpu.pipeline_mode<synchronous>, transform_indices = @transform_14, window_bounds = array<i64: 1, 16>}, {pipeline_mode = #tpu.pipeline_mode<synchronous>, transform_indices = @transform_15, window_bounds = array<i64: 8, 8>}, {transform_indices = @transform_16, window_bounds = array<i64: 2>}, {transform_indices = @transform_17, window_bounds = array<i64: 2, 16, 8>}]} {
    %c0 = arith.constant 0 : index
    %c0_0 = arith.constant 0 : index
    %c0_1 = arith.constant 0 : index
    %0 = vector.load %arg1[%c0, %c0_0, %c0_1] : memref<2x16x8xbf16, #tpu.memory_space<vmem>>, vector<2x16x8xbf16>
    %c0_2 = arith.constant 0 : index
    %c0_3 = arith.constant 0 : index
    %c0_4 = arith.constant 0 : index
    %1 = vector.load %arg2[%c0_2, %c0_3, %c0_4] : memref<2x16x16xf32, #tpu.memory_space<vmem>>, vector<2x16x16xf32>
    %c0_5 = arith.constant 0 : index
    %c0_6 = arith.constant 0 : index
    %c0_7 = arith.constant 0 : index
    %2 = vector.load %arg3[%c0_5, %c0_6, %c0_7] : memref<2x16x16xf32, #tpu.memory_space<vmem>>, vector<2x16x16xf32>
    %c0_8 = arith.constant 0 : index
    %c0_9 = arith.constant 0 : index
    %3 = vector.load %arg4[%c0_8, %c0_9] : memref<16x16xbf16, #tpu.memory_space<vmem>>, vector<16x16xbf16>
    %c0_10 = arith.constant 0 : index
    %c0_11 = arith.constant 0 : index
    %4 = vector.load %arg5[%c0_10, %c0_11] : memref<16x16xbf16, #tpu.memory_space<vmem>>, vector<16x16xbf16>
    %c0_12 = arith.constant 0 : index
    %c0_13 = arith.constant 0 : index
    %5 = vector.load %arg6[%c0_12, %c0_13] : memref<16x16xf32, #tpu.memory_space<vmem>>, vector<16x16xf32>
    %6 = vector.shape_cast %3 : vector<16x16xbf16> to vector<1x16x16xbf16>
    %7 = vector.shape_cast %6 : vector<1x16x16xbf16> to vector<1x16x16xbf16>
    %8 = vector.broadcast %7 : vector<1x16x16xbf16> to vector<2x16x16xbf16>
    %9 = vector.shape_cast %4 : vector<16x16xbf16> to vector<1x16x16xbf16>
    %10 = vector.shape_cast %9 : vector<1x16x16xbf16> to vector<1x16x16xbf16>
    %11 = vector.broadcast %10 : vector<1x16x16xbf16> to vector<2x16x16xbf16>
    "tpu.trace_start"() <{level = 10 : i32, message = "bnm,bmi->bni"}> : () -> ()
    %cst = arith.constant dense<0.000000e+00> : vector<2x16x8xf32>
    %12 = tpu.matmul %8, %0, %cst {dimension_numbers = #tpu.dot_dimension_numbers<[2], [1], [1], [2], [0, 0, 0, 1, 1, 2], [0], [0]>} : vector<2x16x16xbf16>, vector<2x16x8xbf16>, vector<2x16x8xf32> -> vector<2x16x8xf32>
    %cst_14 = arith.constant dense<0.000000e+00> : vector<2x16x8xf32>
    %13 = tpu.matmul %11, %0, %cst_14 {dimension_numbers = #tpu.dot_dimension_numbers<[2], [1], [1], [2], [0, 0, 0, 1, 1, 2], [0], [0]>} : vector<2x16x16xbf16>, vector<2x16x8xbf16>, vector<2x16x8xf32> -> vector<2x16x8xf32>
    "tpu.trace_stop"() : () -> ()
    %14 = vector.shape_cast %12 : vector<2x16x8xf32> to vector<32x8xf32>
    %15 = arith.truncf %14 : vector<32x8xf32> to vector<32x8xbf16>
    %c0_15 = arith.constant 0 : index
    %c0_16 = arith.constant 0 : index
    %16 = vector.load %arg10[%c0_15, %c0_16] : memref<8x8xbf16, #tpu.memory_space<vmem>>, vector<8x8xbf16>
    %cst_17 = arith.constant dense<0.000000e+00> : vector<32x8xf32>
    %17 = tpu.matmul %15, %16, %cst_17 {dimension_numbers = #tpu.dot_dimension_numbers<[1], [0], [0], [1], [0, 0, 1, 1], [], []>} : vector<32x8xbf16>, vector<8x8xbf16>, vector<32x8xf32> -> vector<32x8xf32>
    %c0_18 = arith.constant 0 : index
    %c0_19 = arith.constant 0 : index
    %18 = vector.load %arg11[%c0_18, %c0_19] : memref<1x8xf32, #tpu.memory_space<vmem>>, vector<1x8xf32>
    %19 = vector.broadcast %18 : vector<1x8xf32> to vector<32x8xf32>
    %20 = arith.addf %17, %19 : vector<32x8xf32>
    %21 = arith.negf %20 : vector<32x8xf32>
    %22 = math.exp %21 : vector<32x8xf32>
    %cst_20 = arith.constant 1.000000e+00 : f32
    %23 = vector.broadcast %cst_20 : f32 to vector<32x8xf32>
    %24 = arith.addf %23, %22 : vector<32x8xf32>
    %25 = arith.divf %23, %24 : vector<32x8xf32>
    %26 = arith.truncf %25 : vector<32x8xf32> to vector<32x8xbf16>
    %c0_21 = arith.constant 0 : index
    %c0_22 = arith.constant 0 : index
    %27 = vector.load %arg12[%c0_21, %c0_22] : memref<8x16xbf16, #tpu.memory_space<vmem>>, vector<8x16xbf16>
    %cst_23 = arith.constant dense<0.000000e+00> : vector<32x16xf32>
    %28 = tpu.matmul %26, %27, %cst_23 {dimension_numbers = #tpu.dot_dimension_numbers<[1], [0], [0], [1], [0, 0, 1, 1], [], []>} : vector<32x8xbf16>, vector<8x16xbf16>, vector<32x16xf32> -> vector<32x16xf32>
    %c0_24 = arith.constant 0 : index
    %c0_25 = arith.constant 0 : index
    %29 = vector.load %arg13[%c0_24, %c0_25] : memref<1x16xf32, #tpu.memory_space<vmem>>, vector<1x16xf32>
    %30 = vector.broadcast %29 : vector<1x16xf32> to vector<32x16xf32>
    %31 = arith.addf %28, %30 : vector<32x16xf32>
    %32 = arith.negf %31 : vector<32x16xf32>
    %33 = math.exp %32 : vector<32x16xf32>
    %cst_26 = arith.constant 1.000000e+00 : f32
    %34 = vector.broadcast %cst_26 : f32 to vector<32x16xf32>
    %35 = arith.addf %34, %33 : vector<32x16xf32>
    %36 = arith.divf %34, %35 : vector<32x16xf32>
    %37 = arith.truncf %36 : vector<32x16xf32> to vector<32x16xbf16>
    %c0_27 = arith.constant 0 : index
    %c0_28 = arith.constant 0 : index
    %38 = vector.load %arg14[%c0_27, %c0_28] : memref<16x16xbf16, #tpu.memory_space<vmem>>, vector<16x16xbf16>
    %cst_29 = arith.constant dense<0.000000e+00> : vector<32x16xf32>
    %39 = tpu.matmul %37, %38, %cst_29 {dimension_numbers = #tpu.dot_dimension_numbers<[1], [0], [0], [1], [0, 0, 1, 1], [], []>} : vector<32x16xbf16>, vector<16x16xbf16>, vector<32x16xf32> -> vector<32x16xf32>
    %c0_30 = arith.constant 0 : index
    %c0_31 = arith.constant 0 : index
    %40 = vector.load %arg15[%c0_30, %c0_31] : memref<1x16xf32, #tpu.memory_space<vmem>>, vector<1x16xf32>
    %41 = vector.broadcast %40 : vector<1x16xf32> to vector<32x16xf32>
    %42 = arith.addf %39, %41 : vector<32x16xf32>
    %43 = vector.shape_cast %42 : vector<32x16xf32> to vector<2x16x16xf32>
    %44 = vector.shape_cast %5 : vector<16x16xf32> to vector<1x16x16xf32>
    %45 = vector.broadcast %44 : vector<1x16x16xf32> to vector<2x16x16xf32>
    %46 = arith.mulf %45, %1 : vector<2x16x16xf32>
    %47 = arith.mulf %46, %2 : vector<2x16x16xf32>
    %cst_32 = arith.constant 3.000000e+00 : f32
    %48 = vector.broadcast %cst_32 : f32 to vector<2x16x16xf32>
    %49 = arith.mulf %48, %47 : vector<2x16x16xf32>
    %50 = arith.mulf %49, %43 : vector<2x16x16xf32>
    %51 = math.tanh %50 : vector<2x16x16xf32>
    %52 = arith.truncf %51 : vector<2x16x16xf32> to vector<2x16x16xbf16>
    "tpu.trace_start"() <{level = 10 : i32, message = "bnd,bmd->bnm"}> : () -> ()
    %cst_33 = arith.constant dense<0.000000e+00> : vector<2x16x16xf32>
    %53 = tpu.matmul %52, %52, %cst_33 {dimension_numbers = #tpu.dot_dimension_numbers<[2], [2], [1], [1], [0, 0, 0, 1, 1, 1], [0], [0]>} : vector<2x16x16xbf16>, vector<2x16x16xbf16>, vector<2x16x16xf32> -> vector<2x16x16xf32>
    "tpu.trace_stop"() : () -> ()
    %cst_34 = arith.constant 3.000000e+00 : f32
    %54 = vector.broadcast %cst_34 : f32 to vector<2x16x16xf32>
    %55 = arith.mulf %54, %53 : vector<2x16x16xf32>
    %56 = math.tanh %55 : vector<2x16x16xf32>
    %cst_35 = arith.constant 0.000000e+00 : f32
    %57 = vector.broadcast %cst_35 : f32 to vector<2x16x16xf32>
    %58 = arith.maximumf %56, %57 : vector<2x16x16xf32>
    %59 = arith.truncf %58 : vector<2x16x16xf32> to vector<2x16x16xbf16>
    "tpu.trace_start"() <{level = 10 : i32, message = "bnm,bmi->bni"}> : () -> ()
    %cst_36 = arith.constant dense<0.000000e+00> : vector<2x16x8xf32>
    %60 = tpu.matmul %59, %0, %cst_36 {dimension_numbers = #tpu.dot_dimension_numbers<[2], [1], [1], [2], [0, 0, 0, 1, 1, 2], [0], [0]>} : vector<2x16x16xbf16>, vector<2x16x8xbf16>, vector<2x16x8xf32> -> vector<2x16x8xf32>
    "tpu.trace_stop"() : () -> ()
    %61 = vector.shape_cast %60 : vector<2x16x8xf32> to vector<32x8xf32>
    %62 = arith.truncf %61 : vector<32x8xf32> to vector<32x8xbf16>
    %c0_37 = arith.constant 0 : index
    %c0_38 = arith.constant 0 : index
    %63 = vector.load %arg16[%c0_37, %c0_38] : memref<8x8xbf16, #tpu.memory_space<vmem>>, vector<8x8xbf16>
    %cst_39 = arith.constant dense<0.000000e+00> : vector<32x8xf32>
    %64 = tpu.matmul %62, %63, %cst_39 {dimension_numbers = #tpu.dot_dimension_numbers<[1], [0], [0], [1], [0, 0, 1, 1], [], []>} : vector<32x8xbf16>, vector<8x8xbf16>, vector<32x8xf32> -> vector<32x8xf32>
    %65 = vector.shape_cast %0 : vector<2x16x8xbf16> to vector<32x8xbf16>
    %66 = vector.shape_cast %13 : vector<2x16x8xf32> to vector<32x8xf32>
    %67 = arith.truncf %66 : vector<32x8xf32> to vector<32x8xbf16>
    %68 = tpu.concatenate %65, %67 in 1 : vector<32x8xbf16>, vector<32x8xbf16> -> vector<32x16xbf16>
    %c0_40 = arith.constant 0 : index
    %c0_41 = arith.constant 0 : index
    %69 = vector.load %arg9[%c0_40, %c0_41] : memref<16x128xbf16, #tpu.memory_space<vmem>>, vector<16x128xbf16>
    %cst_42 = arith.constant dense<0.000000e+00> : vector<32x128xf32>
    %70 = tpu.matmul %68, %69, %cst_42 {dimension_numbers = #tpu.dot_dimension_numbers<[1], [0], [0], [1], [0, 0, 1, 1], [], []>} : vector<32x16xbf16>, vector<16x128xbf16>, vector<32x128xf32> -> vector<32x128xf32>
    %c0_43 = arith.constant 0 : index
    %c0_44 = arith.constant 0 : index
    %71 = vector.load %arg7[%c0_43, %c0_44] : memref<16x128xf32, #tpu.memory_space<vmem>>, vector<16x128xf32>
    %72 = vector.shape_cast %71 : vector<16x128xf32> to vector<1x16x128xf32>
    %73 = vector.shape_cast %72 : vector<1x16x128xf32> to vector<1x16x128xf32>
    %74 = vector.broadcast %73 : vector<1x16x128xf32> to vector<2x16x128xf32>
    %75 = vector.shape_cast %74 : vector<2x16x128xf32> to vector<32x128xf32>
    %76 = arith.mulf %70, %75 : vector<32x128xf32>
    %c64_i32 = arith.constant 64 : i32
    %77 = tpu.dynamic_rotate %76 by %c64_i32 dim 1 : vector<32x128xf32>, i32 -> vector<32x128xf32>
    %78 = arith.addf %76, %77 : vector<32x128xf32>
    %c32_i32 = arith.constant 32 : i32
    %79 = tpu.dynamic_rotate %78 by %c32_i32 dim 1 : vector<32x128xf32>, i32 -> vector<32x128xf32>
    %80 = arith.addf %78, %79 : vector<32x128xf32>
    %c16_i32 = arith.constant 16 : i32
    %81 = tpu.dynamic_rotate %80 by %c16_i32 dim 1 : vector<32x128xf32>, i32 -> vector<32x128xf32>
    %82 = arith.addf %80, %81 : vector<32x128xf32>
    %c8_i32 = arith.constant 8 : i32
    %83 = tpu.dynamic_rotate %82 by %c8_i32 dim 1 : vector<32x128xf32>, i32 -> vector<32x128xf32>
    %84 = arith.addf %82, %83 : vector<32x128xf32>
    %85 = vector.extract_strided_slice %84 {offsets = [0, 0], sizes = [32, 8], strides = [1, 1]} : vector<32x128xf32> to vector<32x8xf32>
    %c0_45 = arith.constant 0 : index
    %c0_46 = arith.constant 0 : index
    %86 = vector.load %arg8[%c0_45, %c0_46] : memref<16x8xf32, #tpu.memory_space<vmem>>, vector<16x8xf32>
    %87 = vector.shape_cast %86 : vector<16x8xf32> to vector<1x16x8xf32>
    %88 = vector.shape_cast %87 : vector<1x16x8xf32> to vector<1x16x8xf32>
    %89 = vector.broadcast %88 : vector<1x16x8xf32> to vector<2x16x8xf32>
    %90 = vector.shape_cast %89 : vector<2x16x8xf32> to vector<32x8xf32>
    %91 = arith.addf %85, %90 : vector<32x8xf32>
    %c0_47 = arith.constant 0 : index
    %92 = memref.load %arg17[%c0_47] : memref<2xf32, #tpu.memory_space<smem>>
    %c1 = arith.constant 1 : index
    %93 = memref.load %arg17[%c1] : memref<2xf32, #tpu.memory_space<smem>>
    %94 = vector.broadcast %92 : f32 to vector<32x8xf32>
    %95 = arith.mulf %94, %91 : vector<32x8xf32>
    %96 = vector.broadcast %93 : f32 to vector<32x8xf32>
    %97 = arith.mulf %96, %64 : vector<32x8xf32>
    %98 = arith.addf %95, %97 : vector<32x8xf32>
    %99 = vector.shape_cast %98 : vector<32x8xf32> to vector<2x16x8xf32>
    %c0_48 = arith.constant 0 : index
    %c0_49 = arith.constant 0 : index
    %c0_50 = arith.constant 0 : index
    %100 = vector.load %arg18[%c0_48, %c0_49, %c0_50] : memref<2x16x8xf32, #tpu.memory_space<vmem>>, vector<2x16x8xf32>
    tpu.vector_store %arg18[%c0_48, %c0_49, %c0_50], %99 {strides = array<i32>} : memref<2x16x8xf32, #tpu.memory_space<vmem>>, vector<2x16x8xf32>,
    return
  }
  func.func @transform_0(%arg0: i32) -> (i32, i32, i32) {
    %c0_i32 = arith.constant 0 : i32
    %c0_i32_0 = arith.constant 0 : i32
    %c0_i32_1 = arith.constant 0 : i32
    return %arg0, %c0_i32, %c0_i32_0 : i32, i32, i32
  }
  func.func @transform_1(%arg0: i32) -> (i32, i32, i32) {
    %c0_i32 = arith.constant 0 : i32
    %c0_i32_0 = arith.constant 0 : i32
    %c0_i32_1 = arith.constant 0 : i32
    return %arg0, %c0_i32, %c0_i32_0 : i32, i32, i32
  }
  func.func @transform_2(%arg0: i32) -> (i32, i32, i32) {
    %c0_i32 = arith.constant 0 : i32
    %c0_i32_0 = arith.constant 0 : i32
    %c0_i32_1 = arith.constant 0 : i32
    return %arg0, %c0_i32, %c0_i32_0 : i32, i32, i32
  }
  func.func @transform_3(%arg0: i32) -> (i32, i32) {
    %c0_i32 = arith.constant 0 : i32
    %c0_i32_0 = arith.constant 0 : i32
    %c0_i32_1 = arith.constant 0 : i32
    return %c0_i32, %c0_i32_0 : i32, i32
  }
  func.func @transform_4(%arg0: i32) -> (i32, i32) {
    %c0_i32 = arith.constant 0 : i32
    %c0_i32_0 = arith.constant 0 : i32
    %c0_i32_1 = arith.constant 0 : i32
    return %c0_i32, %c0_i32_0 : i32, i32
  }
  func.func @transform_5(%arg0: i32) -> (i32, i32) {
    %c0_i32 = arith.constant 0 : i32
    %c0_i32_0 = arith.constant 0 : i32
    %c0_i32_1 = arith.constant 0 : i32
    return %c0_i32, %c0_i32_0 : i32, i32
  }
  func.func @transform_6(%arg0: i32) -> (i32, i32) {
    %c0_i32 = arith.constant 0 : i32
    %c0_i32_0 = arith.constant 0 : i32
    %c0_i32_1 = arith.constant 0 : i32
    return %c0_i32, %c0_i32_0 : i32, i32
  }
  func.func @transform_7(%arg0: i32) -> (i32, i32) {
    %c0_i32 = arith.constant 0 : i32
    %c0_i32_0 = arith.constant 0 : i32
    %c0_i32_1 = arith.constant 0 : i32
    return %c0_i32, %c0_i32_0 : i32, i32
  }
  func.func @transform_8(%arg0: i32) -> (i32, i32) {
    %c0_i32 = arith.constant 0 : i32
    %c0_i32_0 = arith.constant 0 : i32
    %c0_i32_1 = arith.constant 0 : i32
    return %c0_i32, %c0_i32_0 : i32, i32
  }
  func.func @transform_9(%arg0: i32) -> (i32, i32) {
    %c0_i32 = arith.constant 0 : i32
    %c0_i32_0 = arith.constant 0 : i32
    %c0_i32_1 = arith.constant 0 : i32
    return %c0_i32, %c0_i32_0 : i32, i32
  }
  func.func @transform_10(%arg0: i32) -> (i32, i32) {
    %c0_i32 = arith.constant 0 : i32
    %c0_i32_0 = arith.constant 0 : i32
    %c0_i32_1 = arith.constant 0 : i32
    return %c0_i32, %c0_i32_0 : i32, i32
  }
  func.func @transform_11(%arg0: i32) -> (i32, i32) {
    %c0_i32 = arith.constant 0 : i32
    %c0_i32_0 = arith.constant 0 : i32
    %c0_i32_1 = arith.constant 0 : i32
    return %c0_i32, %c0_i32_0 : i32, i32
  }
  func.func @transform_12(%arg0: i32) -> (i32, i32) {
    %c0_i32 = arith.constant 0 : i32
    %c0_i32_0 = arith.constant 0 : i32
    %c0_i32_1 = arith.constant 0 : i32
    return %c0_i32, %c0_i32_0 : i32, i32
  }
  func.func @transform_13(%arg0: i32) -> (i32, i32) {
    %c0_i32 = arith.constant 0 : i32
    %c0_i32_0 = arith.constant 0 : i32
    %c0_i32_1 = arith.constant 0 : i32
    return %c0_i32, %c0_i32_0 : i32, i32
  }
  func.func @transform_14(%arg0: i32) -> (i32, i32) {
    %c0_i32 = arith.constant 0 : i32
    %c0_i32_0 = arith.constant 0 : i32
    %c0_i32_1 = arith.constant 0 : i32
    return %c0_i32, %c0_i32_0 : i32, i32
  }
  func.func @transform_15(%arg0: i32) -> (i32, i32) {
    %c0_i32 = arith.constant 0 : i32
    %c0_i32_0 = arith.constant 0 : i32
    %c0_i32_1 = arith.constant 0 : i32
    return %c0_i32, %c0_i32_0 : i32, i32
  }
  func.func @transform_16(%arg0: i32) -> i32 {
    %c0_i32 = arith.constant 0 : i32
    %c0_i32_0 = arith.constant 0 : i32
    return %c0_i32 : i32
  }
  func.func @transform_17(%arg0: i32) -> (i32, i32, i32) {
    %c0_i32 = arith.constant 0 : i32
    %c0_i32_0 = arith.constant 0 : i32
    %c0_i32_1 = arith.constant 0 : i32
    return %arg0, %c0_i32, %c0_i32_0 : i32, i32, i32
  }
}

</mosaic_0001>

<llo_original>
// kernel: tpu_custom_call.1
$region0: #{tpu_custom_call.1}
  #allocation0 [shape = 'u32[]', space=smem, size = 0x4, offset = 0x4, fixed_abs, tag = 'smem constant byte address 0x4 - core index']
  #allocation1 [shape = 'u32[144,128]{1,0:T(1,128)}', space=vmem, size = 0x12000, scoped, tag = 'internal scratch']
  %s0 = inlined_call_operand.vmem [shape: bf16[2,16,8], index: 0, kind: input, shape index: {}]
  %s1 = inlined_call_operand.vmem [shape: f32[2,16,16], index: 1, kind: input, shape index: {}]
  %s2 = inlined_call_operand.hbm [shape: f32[2,16,16], index: 2, kind: input, shape index: {}]
  %s3 = inlined_call_operand.hbm [shape: bf16[16,16], index: 3, kind: input, shape index: {}]
  %s4 = inlined_call_operand.hbm [shape: bf16[16,16], index: 4, kind: input, shape index: {}]
  %s5 = inlined_call_operand.vmem [shape: f32[16,16], index: 5, kind: input, shape index: {}]
  %s6 = inlined_call_operand.vmem [shape: f32[16,128], index: 6, kind: input, shape index: {}]
  %s7 = inlined_call_operand.vmem [shape: f32[16,8], index: 7, kind: input, shape index: {}]
  %s8 = inlined_call_operand.hbm [shape: bf16[16,128], index: 8, kind: input, shape index: {}]
  %s9 = inlined_call_operand.hbm [shape: bf16[8,8], index: 9, kind: input, shape index: {}]
  %s10 = inlined_call_operand.vmem [shape: f32[1,8], index: 10, kind: input, shape index: {}]
  %s11 = inlined_call_operand.vmem [shape: bf16[8,16], index: 11, kind: input, shape index: {}]
  %s12 = inlined_call_operand.vmem [shape: f32[1,16], index: 12, kind: input, shape index: {}]
  %s13 = inlined_call_operand.vmem [shape: bf16[16,16], index: 13, kind: input, shape index: {}]
  %s14 = inlined_call_operand.vmem [shape: f32[1,16], index: 14, kind: input, shape index: {}]
  %s15 = inlined_call_operand.vmem [shape: bf16[8,8], index: 15, kind: input, shape index: {}]
  %s16 = inlined_call_operand.vmem [shape: f32[2], index: 16, kind: input, shape index: {}]
  %s17 = inlined_call_operand.vmem [shape: f32[2,16,8], index: 17, kind: output, shape index: {}]
  %s18 = sld [smem:[#allocation0]]
  $region102: #{tpu_custom_call.1} parent=0
    _
  %s20 = ssub.s32 1, %s18
  %s21 = scalar_select 0, %s20, %s18
  $region1: #{tpu_custom_call.1} parent=0
    #allocation2 [shape = 'u8[16384]{0}', space=vmem, size = 0x4000, scoped, tag = 'input window, operand 2, single buffered']
    #allocation3 [shape = 's32[1]{0}', space=sflag, size = 0x4, scoped, tag = 'scoped memory for tpu_custom_call.1']
    #allocation4 [shape = 's32[1]{0}', space=sflag, size = 0x4, scoped, tag = 'scoped memory for tpu_custom_call.1']
    #allocation5 [shape = 'u8[4096]{0}', space=vmem, size = 0x1000, scoped, tag = 'input window, operand 3, single buffered']
    #allocation6 [shape = 's32[1]{0}', space=sflag, size = 0x4, scoped, tag = 'scoped memory for tpu_custom_call.1']
    #allocation7 [shape = 'u8[4096]{0}', space=vmem, size = 0x1000, scoped, tag = 'input window, operand 4, single buffered']
    #allocation8 [shape = 'u8[4096]{0}', space=vmem, size = 0x1000, scoped, tag = 'input window, operand 8, single buffered']
    #allocation9 [shape = 's32[1]{0}', space=sflag, size = 0x4, scoped, tag = 'scoped memory for tpu_custom_call.1']
    #allocation10 [shape = 'u8[2048]{0}', space=vmem, size = 0x800, scoped, tag = 'input window, operand 9, single buffered']
    #allocation11 [shape = 'u8[512]{0}', space=smem, size = 0x200, scoped, tag = 'input window, operand 16, single buffered']
    %22 = vsyncpa [#allocation3], 0
    %23 = vsyncpa [#allocation6], 0
    %24 = vsyncpa [#allocation9], 0
    %25 = vsyncpa [#allocation4], 0
    // Predicated region
    $region2: #{tpu_custom_call.1} parent=1 // pred_check
      _
    $region3: #{tpu_custom_call.1} parent=1 // pred_check_branch
      %27 = sbr.rel (0) target = $region5
    $region4: #{tpu_custom_call.1} parent=1 // pred_region
      _
    $region5: #{tpu_custom_call.1} parent=1 // pred_fallthru
      _
    // Predicated region
    $region6: #{tpu_custom_call.1} parent=1 // pred_check
      _
    $region7: #{tpu_custom_call.1} parent=1 // pred_check_branch
      %29 = sbr.rel (0) target = $region9
    $region8: #{tpu_custom_call.1} parent=1 // pred_region
      _
    $region9: #{tpu_custom_call.1} parent=1 // pred_fallthru
      _
    // Predicated region
    $region10: #{tpu_custom_call.1} parent=1 // pred_check
      _
    $region11: #{tpu_custom_call.1} parent=1 // pred_check_branch
      %31 = sbr.rel (0) target = $region13
    $region12: #{tpu_custom_call.1} parent=1 // pred_region
      %s33 = ssub.s32 512, 512
      %34 = vsyncadd [#allocation3], %s33
      %s35 = sshll.u32 [#allocation2], 4
      %s36 = int_to_ptr.vmem [resolvable:$true] %s35
      %41 = dma.hbm_to_vmem [thread:$0]  %s2, 512, %s36, [#allocation3], 128, 128, 8
    $region13: #{tpu_custom_call.1} parent=1 // pred_fallthru
      _
    // Predicated region
    $region14: #{tpu_custom_call.1} parent=1 // pred_check
      _
    $region15: #{tpu_custom_call.1} parent=1 // pred_check_branch
      %43 = sbr.rel (0) target = $region17
    $region16: #{tpu_custom_call.1} parent=1 // pred_region
      %s45 = ssub.s32 128, 128
      %46 = vsyncadd [#allocation6], %s45
      %s47 = sshll.u32 [#allocation5], 4
      %s48 = int_to_ptr.vmem [resolvable:$true] %s47
      %53 = dma.hbm_to_vmem [thread:$0]  %s3, 128, %s48, [#allocation6], 64, 64, 4
    $region17: #{tpu_custom_call.1} parent=1 // pred_fallthru
      _
    // Predicated region
    $region18: #{tpu_custom_call.1} parent=1 // pred_check
      _
    $region19: #{tpu_custom_call.1} parent=1 // pred_check_branch
      %55 = sbr.rel (0) target = $region21
    $region20: #{tpu_custom_call.1} parent=1 // pred_region
      %s57 = ssub.s32 128, 128
      %58 = vsyncadd [#allocation6], %s57
      %s59 = sshll.u32 [#allocation7], 4
      %s60 = int_to_ptr.vmem [resolvable:$true] %s59
      %65 = dma.hbm_to_vmem [thread:$0]  %s4, 128, %s60, [#allocation6], 64, 64, 4
    $region21: #{tpu_custom_call.1} parent=1 // pred_fallthru
      _
    // Predicated region
    $region22: #{tpu_custom_call.1} parent=1 // pred_check
      _
    $region23: #{tpu_custom_call.1} parent=1 // pred_check_branch
      %67 = sbr.rel (0) target = $region25
    $region24: #{tpu_custom_call.1} parent=1 // pred_region
      _
    $region25: #{tpu_custom_call.1} parent=1 // pred_fallthru
      _
    // Predicated region
    $region26: #{tpu_custom_call.1} parent=1 // pred_check
      _
    $region27: #{tpu_custom_call.1} parent=1 // pred_check_branch
      %69 = sbr.rel (0) target = $region29
    $region28: #{tpu_custom_call.1} parent=1 // pred_region
      _
    $region29: #{tpu_custom_call.1} parent=1 // pred_fallthru
      _
    // Predicated region
    $region30: #{tpu_custom_call.1} parent=1 // pred_check
      _
    $region31: #{tpu_custom_call.1} parent=1 // pred_check_branch
      %71 = sbr.rel (0) target = $region33
    $region32: #{tpu_custom_call.1} parent=1 // pred_region
      _
    $region33: #{tpu_custom_call.1} parent=1 // pred_fallthru
      _
    // Predicated region
    $region34: #{tpu_custom_call.1} parent=1 // pred_check
      _
    $region35: #{tpu_custom_call.1} parent=1 // pred_check_branch
      %73 = sbr.rel (0) target = $region37
    $region36: #{tpu_custom_call.1} parent=1 // pred_region
      %s75 = ssub.s32 128, 128
      %76 = vsyncadd [#allocation9], %s75
      %s77 = sshll.u32 [#allocation8], 4
      %s78 = int_to_ptr.vmem [resolvable:$true] %s77
      %83 = dma.hbm_to_vmem [thread:$0]  %s8, 128, %s78, [#allocation9], 64, 64, 4
    $region37: #{tpu_custom_call.1} parent=1 // pred_fallthru
      _
    // Predicated region
    $region38: #{tpu_custom_call.1} parent=1 // pred_check
      _
    $region39: #{tpu_custom_call.1} parent=1 // pred_check_branch
      %85 = sbr.rel (0) target = $region41
    $region40: #{tpu_custom_call.1} parent=1 // pred_region
      %s87 = ssub.s32 64, 64
      %88 = vsyncadd [#allocation9], %s87
      %s90 = sshll.u32 [#allocation10], 4
      %s91 = int_to_ptr.vmem [resolvable:$true] %s90
      %93 = dma.hbm_to_vmem [thread:$0]  %s9, 64, %s91, [#allocation9]
    $region41: #{tpu_custom_call.1} parent=1 // pred_fallthru
      _
    // Predicated region
    $region42: #{tpu_custom_call.1} parent=1 // pred_check
      _
    $region43: #{tpu_custom_call.1} parent=1 // pred_check_branch
      %95 = sbr.rel (0) target = $region45
    $region44: #{tpu_custom_call.1} parent=1 // pred_region
      _
    $region45: #{tpu_custom_call.1} parent=1 // pred_fallthru
      _
    // Predicated region
    $region46: #{tpu_custom_call.1} parent=1 // pred_check
      _
    $region47: #{tpu_custom_call.1} parent=1 // pred_check_branch
      %97 = sbr.rel (0) target = $region49
    $region48: #{tpu_custom_call.1} parent=1 // pred_region
      _
    $region49: #{tpu_custom_call.1} parent=1 // pred_fallthru
      _
    // Predicated region
    $region50: #{tpu_custom_call.1} parent=1 // pred_check
      _
    $region51: #{tpu_custom_call.1} parent=1 // pred_check_branch
      %99 = sbr.rel (0) target = $region53
    $region52: #{tpu_custom_call.1} parent=1 // pred_region
      _
    $region53: #{tpu_custom_call.1} parent=1 // pred_fallthru
      _
    // Predicated region
    $region54: #{tpu_custom_call.1} parent=1 // pred_check
      _
    $region55: #{tpu_custom_call.1} parent=1 // pred_check_branch
      %101 = sbr.rel (0) target = $region57
    $region56: #{tpu_custom_call.1} parent=1 // pred_region
      _
    $region57: #{tpu_custom_call.1} parent=1 // pred_fallthru
      _
    // Predicated region
    $region58: #{tpu_custom_call.1} parent=1 // pred_check
      _
    $region59: #{tpu_custom_call.1} parent=1 // pred_check_branch
      %103 = sbr.rel (0) target = $region61
    $region60: #{tpu_custom_call.1} parent=1 // pred_region
      _
    $region61: #{tpu_custom_call.1} parent=1 // pred_fallthru
      _
    // Predicated region
    $region62: #{tpu_custom_call.1} parent=1 // pred_check
      _
    $region63: #{tpu_custom_call.1} parent=1 // pred_check_branch
      %105 = sbr.rel (0) target = $region65
    $region64: #{tpu_custom_call.1} parent=1 // pred_region
      _
    $region65: #{tpu_custom_call.1} parent=1 // pred_fallthru
      _
    // Predicated region
    $region66: #{tpu_custom_call.1} parent=1 // pred_check
      _
    $region67: #{tpu_custom_call.1} parent=1 // pred_check_branch
      %107 = sbr.rel (0) target = $region69
    $region68: #{tpu_custom_call.1} parent=1 // pred_region
      %s109 = ssub.s32 16, 16
      %110 = vsyncadd [#allocation4], %s109
      %s112 = sshll.u32 %s16, 4
      %s113 = int_to_ptr.vmem [resolvable:$true] %s112
      %115 = dma.vmem_to_smem %s113, 16, [#allocation11], [#allocation4]
    $region69: #{tpu_custom_call.1} parent=1 // pred_fallthru
      _
    // Predicated region
    $region70: #{tpu_custom_call.1} parent=1 // pred_check
      _
    $region71: #{tpu_custom_call.1} parent=1 // pred_check_branch
      %117 = sbr.rel (0) target = $region73
    $region72: #{tpu_custom_call.1} parent=1 // pred_region
      %118 = dma.done [#allocation3], 512
    $region73: #{tpu_custom_call.1} parent=1 // pred_fallthru
      _
    // Predicated region
    $region74: #{tpu_custom_call.1} parent=1 // pred_check
      _
    $region75: #{tpu_custom_call.1} parent=1 // pred_check_branch
      %120 = sbr.rel (0) target = $region77
    $region76: #{tpu_custom_call.1} parent=1 // pred_region
      %121 = dma.done [#allocation6], 128
    $region77: #{tpu_custom_call.1} parent=1 // pred_fallthru
      _
    // Predicated region
    $region78: #{tpu_custom_call.1} parent=1 // pred_check
      _
    $region79: #{tpu_custom_call.1} parent=1 // pred_check_branch
      %123 = sbr.rel (0) target = $region81
    $region80: #{tpu_custom_call.1} parent=1 // pred_region
      %124 = dma.done [#allocation6], 128
    $region81: #{tpu_custom_call.1} parent=1 // pred_fallthru
      _
    // Predicated region
    $region82: #{tpu_custom_call.1} parent=1 // pred_check
      _
    $region83: #{tpu_custom_call.1} parent=1 // pred_check_branch
      %126 = sbr.rel (0) target = $region85
    $region84: #{tpu_custom_call.1} parent=1 // pred_region
      %127 = dma.done [#allocation9], 128
    $region85: #{tpu_custom_call.1} parent=1 // pred_fallthru
      _
    // Predicated region
    $region86: #{tpu_custom_call.1} parent=1 // pred_check
      _
    $region87: #{tpu_custom_call.1} parent=1 // pred_check_branch
      %129 = sbr.rel (0) target = $region89
    $region88: #{tpu_custom_call.1} parent=1 // pred_region
      %130 = dma.done [#allocation9], 64
    $region89: #{tpu_custom_call.1} parent=1 // pred_fallthru
      _
    // Predicated region
    $region90: #{tpu_custom_call.1} parent=1 // pred_check
      _
    $region91: #{tpu_custom_call.1} parent=1 // pred_check_branch
      %132 = sbr.rel (0) target = $region93
    $region92: #{tpu_custom_call.1} parent=1 // pred_region
      %133 = dma.done [#allocation4], 16
    $region93: #{tpu_custom_call.1} parent=1 // pred_fallthru
      _
    %134 = sfence
    %v136 = vld [vmem:[%s0] sm:$0xf]
    %v137 = vld [vmem:[%s0 + $0x4] sm:$0xf]
    %v138 = vld [vmem:[%s0 + $0x8] sm:$0xf]
    %v139 = vld [vmem:[%s0 + $0xc] sm:$0xf]
    %v140 = vld [vmem:[%s1] sm:$0xff]
    %v141 = vld [vmem:[%s1 + $0x8] sm:$0xff]
    %v142 = vld [vmem:[%s1 + $0x10] sm:$0xff]
    %v143 = vld [vmem:[%s1 + $0x18] sm:$0xff]
    %v144 = vld [vmem:[#allocation2] sm:$0xff]
    %v145 = vld [vmem:[#allocation2 + $0x8] sm:$0xff]
    %v146 = vld [vmem:[#allocation2 + $0x10] sm:$0xff]
    %v147 = vld [vmem:[#allocation2 + $0x18] sm:$0xff]
    %v148 = vld [vmem:[#allocation5] sm:$0xf]
    %v149 = vld [vmem:[#allocation5 + $0x4] sm:$0xf]
    %v150 = vld [vmem:[#allocation7] sm:$0xf]
    %v151 = vld [vmem:[#allocation7 + $0x4] sm:$0xf]
    %v152 = vld [vmem:[%s5] sm:$0xff]
    %v153 = vld [vmem:[%s5 + $0x8] sm:$0xff]
    %v156 = vunpack.c.l.b16 %v148
    %v157 = vunpack.c.l.b16 %v149
    %v158 = vpack.c.b16 %v157, %v156
    %v161 = vunpack.c.l.b16 %v136
    %v162 = vunpack.c.l.b16 %v137
    %v163 = vpack.c.b16 %v162, %v161
    %vm165 = vcmask 130048
    %v167 = vsel %vm165, %v158, 0
    %169 = vmatprep.subr.bf16.mxu0 0
    %170 = vmatpush1.bf16.msra.mxu0 %v163
    %171 = vmatprep.subr.bf16.mxu0 0
    %172 = vmatpush1.bf16.msra.mxu0 0
    %173 = vmatprep.subr.bf16.mxu0 0
    %174 = vmatpush1.bf16.msra.mxu0 0
    %175 = vmatprep.subr.bf16.mxu0 0
    %176 = vmatpush1.bf16.msra.mxu0 0
    %177 = vmatprep.subr.bf16.mxu0 0
    %178 = vmatpush1.bf16.msra.mxu0 0
    %179 = vmatprep.subr.bf16.mxu0 0
    %180 = vmatpush1.bf16.msra.mxu0 0
    %181 = vmatprep.subr.bf16.mxu0 0
    %182 = vmatpush1.bf16.msra.mxu0 0
    %183 = vmatprep.subr.bf16.mxu0 0
    %184 = vmatpush1.bf16.msra.mxu0 0
    %185 = vmatprep.subr.bf16.mxu0 0
    %186 = vmatpush1.bf16.msra.mxu0 0
    %187 = vmatprep.subr.bf16.mxu0 0
    %188 = vmatpush1.bf16.msra.mxu0 0
    %189 = vmatprep.subr.bf16.mxu0 0
    %190 = vmatpush1.bf16.msra.mxu0 0
    %191 = vmatprep.subr.bf16.mxu0 0
    %192 = vmatpush1.bf16.msra.mxu0 0
    %193 = vmatprep.subr.bf16.mxu0 0
    %194 = vmatpush1.bf16.msra.mxu0 0
    %195 = vmatprep.subr.bf16.mxu0 0
    %196 = vmatpush1.bf16.msra.mxu0 0
    %197 = vmatprep.subr.bf16.mxu0 0
    %198 = vmatpush1.bf16.msra.mxu0 0
    %199 = vmatprep.subr.bf16.mxu0 0
    %200 = vmatpush1.bf16.msra.mxu0 0
    %201 = vmatprep.mubr.bf16.mxu0 0
    %202 = vmatmul.mubr.bf16.gmra.mrb[0].mxu0 %v167
    %v203 = vpop.f32.mrb[0].mxu0
    %v204 = vadd.f32 0.0, %v203
    %v205 = vpop.f32.mrb[0].mxu0
    %v206 = vpop.f32.mrb[0].mxu0
    %v207 = vadd.f32 0.0, %v206
    %v208 = vpop.f32.mrb[0].mxu0
    %209 = vdwg.mxu0
    %v212 = vunpack.c.l.b16 %v138
    %v213 = vunpack.c.l.b16 %v139
    %v214 = vpack.c.b16 %v213, %v212
    %216 = vmatprep.subr.bf16.mxu0 0
    %217 = vmatpush1.bf16.msra.mxu0 %v214
    %218 = vmatprep.subr.bf16.mxu0 0
    %219 = vmatpush1.bf16.msra.mxu0 0
    %220 = vmatprep.subr.bf16.mxu0 0
    %221 = vmatpush1.bf16.msra.mxu0 0
    %222 = vmatprep.subr.bf16.mxu0 0
    %223 = vmatpush1.bf16.msra.mxu0 0
    %224 = vmatprep.subr.bf16.mxu0 0
    %225 = vmatpush1.bf16.msra.mxu0 0
    %226 = vmatprep.subr.bf16.mxu0 0
    %227 = vmatpush1.bf16.msra.mxu0 0
    %228 = vmatprep.subr.bf16.mxu0 0
    %229 = vmatpush1.bf16.msra.mxu0 0
    %230 = vmatprep.subr.bf16.mxu0 0
    %231 = vmatpush1.bf16.msra.mxu0 0
    %232 = vmatprep.subr.bf16.mxu0 0
    %233 = vmatpush1.bf16.msra.mxu0 0
    %234 = vmatprep.subr.bf16.mxu0 0
    %235 = vmatpush1.bf16.msra.mxu0 0
    %236 = vmatprep.subr.bf16.mxu0 0
    %237 = vmatpush1.bf16.msra.mxu0 0
    %238 = vmatprep.subr.bf16.mxu0 0
    %239 = vmatpush1.bf16.msra.mxu0 0
    %240 = vmatprep.subr.bf16.mxu0 0
    %241 = vmatpush1.bf16.msra.mxu0 0
    %242 = vmatprep.subr.bf16.mxu0 0
    %243 = vmatpush1.bf16.msra.mxu0 0
    %244 = vmatprep.subr.bf16.mxu0 0
    %245 = vmatpush1.bf16.msra.mxu0 0
    %246 = vmatprep.subr.bf16.mxu0 0
    %247 = vmatpush1.bf16.msra.mxu0 0
    %248 = vmatprep.mubr.bf16.mxu0 0
    %249 = vmatmul.mubr.bf16.gmra.mrb[0].mxu0 %v167
    %v250 = vpop.f32.mrb[0].mxu0
    %v251 = vadd.f32 0.0, %v250
    %v252 = vpop.f32.mrb[0].mxu0
    %v253 = vpop.f32.mrb[0].mxu0
    %v254 = vadd.f32 0.0, %v253
    %v255 = vpop.f32.mrb[0].mxu0
    %256 = vdwg.mxu0
    %v259 = vunpack.c.l.b16 %v150
    %v260 = vunpack.c.l.b16 %v151
    %v261 = vpack.c.b16 %v260, %v259
    %v263 = vsel %vm165, %v261, 0
    %265 = vmatprep.subr.bf16.mxu0 0
    %266 = vmatpush1.bf16.msra.mxu0 %v163
    %267 = vmatprep.subr.bf16.mxu0 0
    %268 = vmatpush1.bf16.msra.mxu0 0
    %269 = vmatprep.subr.bf16.mxu0 0
    %270 = vmatpush1.bf16.msra.mxu0 0
    %271 = vmatprep.subr.bf16.mxu0 0
    %272 = vmatpush1.bf16.msra.mxu0 0
    %273 = vmatprep.subr.bf16.mxu0 0
    %274 = vmatpush1.bf16.msra.mxu0 0
    %275 = vmatprep.subr.bf16.mxu0 0
    %276 = vmatpush1.bf16.msra.mxu0 0
    %277 = vmatprep.subr.bf16.mxu0 0
    %278 = vmatpush1.bf16.msra.mxu0 0
    %279 = vmatprep.subr.bf16.mxu0 0
    %280 = vmatpush1.bf16.msra.mxu0 0
    %281 = vmatprep.subr.bf16.mxu0 0
    %282 = vmatpush1.bf16.msra.mxu0 0
    %283 = vmatprep.subr.bf16.mxu0 0
    %284 = vmatpush1.bf16.msra.mxu0 0
    %285 = vmatprep.subr.bf16.mxu0 0
    %286 = vmatpush1.bf16.msra.mxu0 0
    %287 = vmatprep.subr.bf16.mxu0 0
    %288 = vmatpush1.bf16.msra.mxu0 0
    %289 = vmatprep.subr.bf16.mxu0 0
    %290 = vmatpush1.bf16.msra.mxu0 0
    %291 = vmatprep.subr.bf16.mxu0 0
    %292 = vmatpush1.bf16.msra.mxu0 0
    %293 = vmatprep.subr.bf16.mxu0 0
    %294 = vmatpush1.bf16.msra.mxu0 0
    %295 = vmatprep.subr.bf16.mxu0 0
    %296 = vmatpush1.bf16.msra.mxu0 0
    %297 = vmatprep.mubr.bf16.mxu0 0
    %298 = vmatmul.mubr.bf16.gmra.mrb[0].mxu0 %v263
    %v299 = vpop.f32.mrb[0].mxu0
    %v300 = vadd.f32 0.0, %v299
    %v301 = vpop.f32.mrb[0].mxu0
    %v302 = vpop.f32.mrb[0].mxu0
    %v303 = vadd.f32 0.0, %v302
    %v304 = vpop.f32.mrb[0].mxu0
    %305 = vdwg.mxu0
    %306 = vmatprep.subr.bf16.mxu0 0
    %307 = vmatpush1.bf16.msra.mxu0 %v214
    %308 = vmatprep.subr.bf16.mxu0 0
    %309 = vmatpush1.bf16.msra.mxu0 0
    %310 = vmatprep.subr.bf16.mxu0 0
    %311 = vmatpush1.bf16.msra.mxu0 0
    %312 = vmatprep.subr.bf16.mxu0 0
    %313 = vmatpush1.bf16.msra.mxu0 0
    %314 = vmatprep.subr.bf16.mxu0 0
    %315 = vmatpush1.bf16.msra.mxu0 0
    %316 = vmatprep.subr.bf16.mxu0 0
    %317 = vmatpush1.bf16.msra.mxu0 0
    %318 = vmatprep.subr.bf16.mxu0 0
    %319 = vmatpush1.bf16.msra.mxu0 0
    %320 = vmatprep.subr.bf16.mxu0 0
    %321 = vmatpush1.bf16.msra.mxu0 0
    %322 = vmatprep.subr.bf16.mxu0 0
    %323 = vmatpush1.bf16.msra.mxu0 0
    %324 = vmatprep.subr.bf16.mxu0 0
    %325 = vmatpush1.bf16.msra.mxu0 0
    %326 = vmatprep.subr.bf16.mxu0 0
    %327 = vmatpush1.bf16.msra.mxu0 0
    %328 = vmatprep.subr.bf16.mxu0 0
    %329 = vmatpush1.bf16.msra.mxu0 0
    %330 = vmatprep.subr.bf16.mxu0 0
    %331 = vmatpush1.bf16.msra.mxu0 0
    %332 = vmatprep.subr.bf16.mxu0 0
    %333 = vmatpush1.bf16.msra.mxu0 0
    %334 = vmatprep.subr.bf16.mxu0 0
    %335 = vmatpush1.bf16.msra.mxu0 0
    %336 = vmatprep.subr.bf16.mxu0 0
    %337 = vmatpush1.bf16.msra.mxu0 0
    %338 = vmatprep.mubr.bf16.mxu0 0
    %339 = vmatmul.mubr.bf16.gmra.mrb[0].mxu0 %v263
    %v340 = vpop.f32.mrb[0].mxu0
    %v341 = vadd.f32 0.0, %v340
    %v342 = vpop.f32.mrb[0].mxu0
    %v343 = vpop.f32.mrb[0].mxu0
    %v344 = vadd.f32 0.0, %v343
    %v345 = vpop.f32.mrb[0].mxu0
    %346 = vdwg.mxu0
    %v347 = vpack.c.bf16 %v207, %v204
    %v348 = vpack.c.bf16 %v254, %v251
    %v349 = vld [vmem:[#allocation10] sm:$0xf]
    %v350 = vld [vmem:[%s10] sm:$0x1]
    %v352 = vlaneseq
    %v353 = vshrl.u32 %v352, 7
    %v354 = vsub.s32 0, %v353
    %v355 = vrot.slane %v350, %v354
    %vm357 = vcmask 64512
    %v359 = vsel %vm357, %v347, 0
    %v362 = vsel %vm357, %v348, 0
    %vm364 = vcmask 1043456
    %v366 = vsel %vm364, %v349, 0
    %368 = vmatprep.subr.bf16.mxu0 0
    %369 = vmatpush1.bf16.msra.mxu0 %v366
    %370 = vmatprep.subr.bf16.mxu0 0
    %371 = vmatpush1.bf16.msra.mxu0 0
    %372 = vmatprep.subr.bf16.mxu0 0
    %373 = vmatpush1.bf16.msra.mxu0 0
    %374 = vmatprep.subr.bf16.mxu0 0
    %375 = vmatpush1.bf16.msra.mxu0 0
    %376 = vmatprep.subr.bf16.mxu0 0
    %377 = vmatpush1.bf16.msra.mxu0 0
    %378 = vmatprep.subr.bf16.mxu0 0
    %379 = vmatpush1.bf16.msra.mxu0 0
    %380 = vmatprep.subr.bf16.mxu0 0
    %381 = vmatpush1.bf16.msra.mxu0 0
    %382 = vmatprep.subr.bf16.mxu0 0
    %383 = vmatpush1.bf16.msra.mxu0 0
    %384 = vmatprep.subr.bf16.mxu0 0
    %385 = vmatpush1.bf16.msra.mxu0 0
    %386 = vmatprep.subr.bf16.mxu0 0
    %387 = vmatpush1.bf16.msra.mxu0 0
    %388 = vmatprep.subr.bf16.mxu0 0
    %389 = vmatpush1.bf16.msra.mxu0 0
    %390 = vmatprep.subr.bf16.mxu0 0
    %391 = vmatpush1.bf16.msra.mxu0 0
    %392 = vmatprep.subr.bf16.mxu0 0
    %393 = vmatpush1.bf16.msra.mxu0 0
    %394 = vmatprep.subr.bf16.mxu0 0
    %395 = vmatpush1.bf16.msra.mxu0 0
    %396 = vmatprep.subr.bf16.mxu0 0
    %397 = vmatpush1.bf16.msra.mxu0 0
    %398 = vmatprep.subr.bf16.mxu0 0
    %399 = vmatpush1.bf16.msra.mxu0 0
    %400 = vmatprep.mubr.bf16.mxu0 0
    %401 = vmatmul.mubr.bf16.gmra.mrb[0].mxu0 %v359
    %v402 = vpop.f32.mrb[0].mxu0
    %v403 = vadd.f32 %v355, %v402
    %v404 = vpop.f32.mrb[0].mxu0
    %v405 = vpop.f32.mrb[0].mxu0
    %v406 = vadd.f32 %v355, %v405
    %v407 = vpop.f32.mrb[0].mxu0
    %408 = vmatprep.mubr.bf16.mxu0 0
    %409 = vmatmul.mubr.bf16.gmra.mrb[0].mxu0 %v362
    %v410 = vpop.f32.mrb[0].mxu0
    %v411 = vadd.f32 %v355, %v410
    %v412 = vpop.f32.mrb[0].mxu0
    %v413 = vpop.f32.mrb[0].mxu0
    %v414 = vadd.f32 %v355, %v413
    %v415 = vpop.f32.mrb[0].mxu0
    %416 = vdwg.mxu0
    %v417 = vxor.u32 %v403, 2147483648
    %v418 = vxor.u32 %v406, 2147483648
    %v419 = vxor.u32 %v411, 2147483648
    %v420 = vxor.u32 %v414, 2147483648
    %v421 = vmul.f32 %v417, 1.442695
    %v422 = vpow.pop %v421
    %v423 = vmul.f32 %v418, 1.442695
    %v424 = vpow.pop %v423
    %v425 = vmul.f32 %v419, 1.442695
    %v426 = vpow.pop %v425
    %v427 = vmul.f32 %v420, 1.442695
    %v428 = vpow.pop %v427
    %v429 = vadd.f32 %v422, 1.0
    %v430 = vadd.f32 %v424, 1.0
    %v431 = vadd.f32 %v426, 1.0
    %v432 = vadd.f32 %v428, 1.0
    %v433 = vrcp.pop %v429
    %v434 = vmul.f32 1.0, %v433
    %v435 = vrcp.pop %v430
    %v436 = vmul.f32 1.0, %v435
    %v437 = vrcp.pop %v431
    %v438 = vmul.f32 1.0, %v437
    %v439 = vrcp.pop %v432
    %v440 = vmul.f32 1.0, %v439
    %v441 = vpack.c.bf16 %v436, %v434
    %v442 = vpack.c.bf16 %v440, %v438
    %v443 = vld [vmem:[%s11] sm:$0xf]
    %v444 = vld [vmem:[%s12] sm:$0x1]
    %v446 = vlaneseq
    %v447 = vshrl.u32 %v446, 7
    %v448 = vsub.s32 0, %v447
    %v449 = vrot.slane %v444, %v448
    %v452 = vsel %vm357, %v441, 0
    %v455 = vsel %vm357, %v442, 0
    %v458 = vsel %vm364, %v443, 0
    %460 = vmatprep.subr.bf16.mxu0 0
    %461 = vmatpush1.bf16.msra.mxu0 %v458
    %462 = vmatprep.subr.bf16.mxu0 0
    %463 = vmatpush1.bf16.msra.mxu0 0
    %464 = vmatprep.subr.bf16.mxu0 0
    %465 = vmatpush1.bf16.msra.mxu0 0
    %466 = vmatprep.subr.bf16.mxu0 0
    %467 = vmatpush1.bf16.msra.mxu0 0
    %468 = vmatprep.subr.bf16.mxu0 0
    %469 = vmatpush1.bf16.msra.mxu0 0
    %470 = vmatprep.subr.bf16.mxu0 0
    %471 = vmatpush1.bf16.msra.mxu0 0
    %472 = vmatprep.subr.bf16.mxu0 0
    %473 = vmatpush1.bf16.msra.mxu0 0
    %474 = vmatprep.subr.bf16.mxu0 0
    %475 = vmatpush1.bf16.msra.mxu0 0
    %476 = vmatprep.subr.bf16.mxu0 0
    %477 = vmatpush1.bf16.msra.mxu0 0
    %478 = vmatprep.subr.bf16.mxu0 0
    %479 = vmatpush1.bf16.msra.mxu0 0
    %480 = vmatprep.subr.bf16.mxu0 0
    %481 = vmatpush1.bf16.msra.mxu0 0
    %482 = vmatprep.subr.bf16.mxu0 0
    %483 = vmatpush1.bf16.msra.mxu0 0
    %484 = vmatprep.subr.bf16.mxu0 0
    %485 = vmatpush1.bf16.msra.mxu0 0
    %486 = vmatprep.subr.bf16.mxu0 0
    %487 = vmatpush1.bf16.msra.mxu0 0
    %488 = vmatprep.subr.bf16.mxu0 0
    %489 = vmatpush1.bf16.msra.mxu0 0
    %490 = vmatprep.subr.bf16.mxu0 0
    %491 = vmatpush1.bf16.msra.mxu0 0
    %492 = vmatprep.mubr.bf16.mxu0 0
    %493 = vmatmul.mubr.bf16.gmra.mrb[0].mxu0 %v452
    %v494 = vpop.f32.mrb[0].mxu0
    %v495 = vadd.f32 %v449, %v494
    %v496 = vpop.f32.mrb[0].mxu0
    %v497 = vpop.f32.mrb[0].mxu0
    %v498 = vadd.f32 %v449, %v497
    %v499 = vpop.f32.mrb[0].mxu0
    %500 = vmatprep.mubr.bf16.mxu0 0
    %501 = vmatmul.mubr.bf16.gmra.mrb[0].mxu0 %v455
    %v502 = vpop.f32.mrb[0].mxu0
    %v503 = vadd.f32 %v449, %v502
    %v504 = vpop.f32.mrb[0].mxu0
    %v505 = vpop.f32.mrb[0].mxu0
    %v506 = vadd.f32 %v449, %v505
    %v507 = vpop.f32.mrb[0].mxu0
    %508 = vdwg.mxu0
    %v509 = vxor.u32 %v495, 2147483648
    %v510 = vxor.u32 %v498, 2147483648
    %v511 = vxor.u32 %v503, 2147483648
    %v512 = vxor.u32 %v506, 2147483648
    %v513 = vmul.f32 %v509, 1.442695
    %v514 = vpow.pop %v513
    %v515 = vmul.f32 %v510, 1.442695
    %v516 = vpow.pop %v515
    %v517 = vmul.f32 %v511, 1.442695
    %v518 = vpow.pop %v517
    %v519 = vmul.f32 %v512, 1.442695
    %v520 = vpow.pop %v519
    %v521 = vadd.f32 %v514, 1.0
    %v522 = vadd.f32 %v516, 1.0
    %v523 = vadd.f32 %v518, 1.0
    %v524 = vadd.f32 %v520, 1.0
    %v525 = vrcp.pop %v521
    %v526 = vmul.f32 1.0, %v525
    %v527 = vrcp.pop %v522
    %v528 = vmul.f32 1.0, %v527
    %v529 = vrcp.pop %v523
    %v530 = vmul.f32 1.0, %v529
    %v531 = vrcp.pop %v524
    %v532 = vmul.f32 1.0, %v531
    %v533 = vpack.c.bf16 %v528, %v526
    %v534 = vpack.c.bf16 %v532, %v530
    %v535 = vld [vmem:[%s13] sm:$0xf]
    %v536 = vld [vmem:[%s13 + $0x4] sm:$0xf]
    %v537 = vld [vmem:[%s14] sm:$0x1]
    %v539 = vlaneseq
    %v540 = vshrl.u32 %v539, 7
    %v541 = vsub.s32 0, %v540
    %v542 = vrot.slane %v537, %v541
    %v546 = vunpack.c.l.b16 %v535
    %v547 = vunpack.c.l.b16 %v536
    %v548 = vpack.c.b16 %v547, %v546
    %v551 = vsel %vm165, %v533, 0
    %v554 = vsel %vm165, %v534, 0
    %556 = vmatprep.subr.bf16.mxu0 0
    %557 = vmatpush1.bf16.msra.mxu0 %v548
    %558 = vmatprep.subr.bf16.mxu0 0
    %559 = vmatpush1.bf16.msra.mxu0 0
    %560 = vmatprep.subr.bf16.mxu0 0
    %561 = vmatpush1.bf16.msra.mxu0 0
    %562 = vmatprep.subr.bf16.mxu0 0
    %563 = vmatpush1.bf16.msra.mxu0 0
    %564 = vmatprep.subr.bf16.mxu0 0
    %565 = vmatpush1.bf16.msra.mxu0 0
    %566 = vmatprep.subr.bf16.mxu0 0
    %567 = vmatpush1.bf16.msra.mxu0 0
    %568 = vmatprep.subr.bf16.mxu0 0
    %569 = vmatpush1.bf16.msra.mxu0 0
    %570 = vmatprep.subr.bf16.mxu0 0
    %571 = vmatpush1.bf16.msra.mxu0 0
    %572 = vmatprep.subr.bf16.mxu0 0
    %573 = vmatpush1.bf16.msra.mxu0 0
    %574 = vmatprep.subr.bf16.mxu0 0
    %575 = vmatpush1.bf16.msra.mxu0 0
    %576 = vmatprep.subr.bf16.mxu0 0
    %577 = vmatpush1.bf16.msra.mxu0 0
    %578 = vmatprep.subr.bf16.mxu0 0
    %579 = vmatpush1.bf16.msra.mxu0 0
    %580 = vmatprep.subr.bf16.mxu0 0
    %581 = vmatpush1.bf16.msra.mxu0 0
    %582 = vmatprep.subr.bf16.mxu0 0
    %583 = vmatpush1.bf16.msra.mxu0 0
    %584 = vmatprep.subr.bf16.mxu0 0
    %585 = vmatpush1.bf16.msra.mxu0 0
    %586 = vmatprep.subr.bf16.mxu0 0
    %587 = vmatpush1.bf16.msra.mxu0 0
    %588 = vmatprep.mubr.bf16.mxu0 0
    %589 = vmatmul.mubr.bf16.gmra.mrb[0].mxu0 %v551
    %v590 = vpop.f32.mrb[0].mxu0
    %v591 = vadd.f32 %v542, %v590
    %v592 = vpop.f32.mrb[0].mxu0
    %v593 = vpop.f32.mrb[0].mxu0
    %v594 = vadd.f32 %v542, %v593
    %v595 = vpop.f32.mrb[0].mxu0
    %596 = vmatprep.mubr.bf16.mxu0 0
    %597 = vmatmul.mubr.bf16.gmra.mrb[0].mxu0 %v554
    %v598 = vpop.f32.mrb[0].mxu0
    %v599 = vadd.f32 %v542, %v598
    %v600 = vpop.f32.mrb[0].mxu0
    %v601 = vpop.f32.mrb[0].mxu0
    %v602 = vadd.f32 %v542, %v601
    %v603 = vpop.f32.mrb[0].mxu0
    %604 = vdwg.mxu0
    %v605 = vmul.f32 %v152, %v140
    %v606 = vmul.f32 %v153, %v141
    %v607 = vmul.f32 %v152, %v142
    %v608 = vmul.f32 %v153, %v143
    %v609 = vmul.f32 %v605, %v144
    %v610 = vmul.f32 %v606, %v145
    %v611 = vmul.f32 %v607, %v146
    %v612 = vmul.f32 %v608, %v147
    %v613 = vmul.f32 %v609, 3.0
    %v614 = vmul.f32 %v610, 3.0
    %v615 = vmul.f32 %v611, 3.0
    %v616 = vmul.f32 %v612, 3.0
    %v617 = vmul.f32 %v613, %v591
    %v618 = vmul.f32 %v614, %v594
    %v619 = vmul.f32 %v615, %v599
    %v620 = vmul.f32 %v616, %v602
    %v621 = vtanh.pop %v617
    %v622 = vtanh.pop %v618
    %v623 = vtanh.pop %v619
    %v624 = vtanh.pop %v620
    %v625 = vpack.c.bf16 %v622, %v621
    %v626 = vpack.c.bf16 %v624, %v623
    %v628 = vsel %vm165, %v625, 0
    %630 = vmatprep.subr.bf16.mxu0 0
    %631 = vmatpush1.bf16.xpose.msra.mxu0 %v628
    %632 = vmatprep.subr.bf16.mxu0 0
    %633 = vmatpush1.bf16.xpose.msra.mxu0 0
    %634 = vmatprep.subr.bf16.mxu0 0
    %635 = vmatpush1.bf16.xpose.msra.mxu0 0
    %636 = vmatprep.subr.bf16.mxu0 0
    %637 = vmatpush1.bf16.xpose.msra.mxu0 0
    %638 = vmatprep.subr.bf16.mxu0 0
    %639 = vmatpush1.bf16.xpose.msra.mxu0 0
    %640 = vmatprep.subr.bf16.mxu0 0
    %641 = vmatpush1.bf16.xpose.msra.mxu0 0
    %642 = vmatprep.subr.bf16.mxu0 0
    %643 = vmatpush1.bf16.xpose.msra.mxu0 0
    %644 = vmatprep.subr.bf16.mxu0 0
    %645 = vmatpush1.bf16.xpose.msra.mxu0 0
    %646 = vmatprep.subr.bf16.mxu0 0
    %647 = vmatpush1.bf16.xpose.msra.mxu0 0
    %648 = vmatprep.subr.bf16.mxu0 0
    %649 = vmatpush1.bf16.xpose.msra.mxu0 0
    %650 = vmatprep.subr.bf16.mxu0 0
    %651 = vmatpush1.bf16.xpose.msra.mxu0 0
    %652 = vmatprep.subr.bf16.mxu0 0
    %653 = vmatpush1.bf16.xpose.msra.mxu0 0
    %654 = vmatprep.subr.bf16.mxu0 0
    %655 = vmatpush1.bf16.xpose.msra.mxu0 0
    %656 = vmatprep.subr.bf16.mxu0 0
    %657 = vmatpush1.bf16.xpose.msra.mxu0 0
    %658 = vmatprep.subr.bf16.mxu0 0
    %659 = vmatpush1.bf16.xpose.msra.mxu0 0
    %660 = vmatprep.subr.bf16.mxu0 0
    %661 = vmatpush1.bf16.xpose.msra.mxu0 0
    %662 = vmatprep.mubr.bf16.mxu0 0
    %663 = vmatmul.mubr.bf16.gmra.mrb[0].mxu0 %v628
    %v664 = vpop.f32.mrb[0].mxu0
    %v665 = vadd.f32 0.0, %v664
    %v666 = vpop.f32.mrb[0].mxu0
    %v667 = vpop.f32.mrb[0].mxu0
    %v668 = vadd.f32 0.0, %v667
    %v669 = vpop.f32.mrb[0].mxu0
    %670 = vdwg.mxu0
    %v672 = vsel %vm165, %v626, 0
    %674 = vmatprep.subr.bf16.mxu0 0
    %675 = vmatpush1.bf16.xpose.msra.mxu0 %v672
    %676 = vmatprep.subr.bf16.mxu0 0
    %677 = vmatpush1.bf16.xpose.msra.mxu0 0
    %678 = vmatprep.subr.bf16.mxu0 0
    %679 = vmatpush1.bf16.xpose.msra.mxu0 0
    %680 = vmatprep.subr.bf16.mxu0 0
    %681 = vmatpush1.bf16.xpose.msra.mxu0 0
    %682 = vmatprep.subr.bf16.mxu0 0
    %683 = vmatpush1.bf16.xpose.msra.mxu0 0
    %684 = vmatprep.subr.bf16.mxu0 0
    %685 = vmatpush1.bf16.xpose.msra.mxu0 0
    %686 = vmatprep.subr.bf16.mxu0 0
    %687 = vmatpush1.bf16.xpose.msra.mxu0 0
    %688 = vmatprep.subr.bf16.mxu0 0
    %689 = vmatpush1.bf16.xpose.msra.mxu0 0
    %690 = vmatprep.subr.bf16.mxu0 0
    %691 = vmatpush1.bf16.xpose.msra.mxu0 0
    %692 = vmatprep.subr.bf16.mxu0 0
    %693 = vmatpush1.bf16.xpose.msra.mxu0 0
    %694 = vmatprep.subr.bf16.mxu0 0
    %695 = vmatpush1.bf16.xpose.msra.mxu0 0
    %696 = vmatprep.subr.bf16.mxu0 0
    %697 = vmatpush1.bf16.xpose.msra.mxu0 0
    %698 = vmatprep.subr.bf16.mxu0 0
    %699 = vmatpush1.bf16.xpose.msra.mxu0 0
    %700 = vmatprep.subr.bf16.mxu0 0
    %701 = vmatpush1.bf16.xpose.msra.mxu0 0
    %702 = vmatprep.subr.bf16.mxu0 0
    %703 = vmatpush1.bf16.xpose.msra.mxu0 0
    %704 = vmatprep.subr.bf16.mxu0 0
    %705 = vmatpush1.bf16.xpose.msra.mxu0 0
    %706 = vmatprep.mubr.bf16.mxu0 0
    %707 = vmatmul.mubr.bf16.gmra.mrb[0].mxu0 %v672
    %v708 = vpop.f32.mrb[0].mxu0
    %v709 = vadd.f32 0.0, %v708
    %v710 = vpop.f32.mrb[0].mxu0
    %v711 = vpop.f32.mrb[0].mxu0
    %v712 = vadd.f32 0.0, %v711
    %v713 = vpop.f32.mrb[0].mxu0
    %714 = vdwg.mxu0
    %v715 = vmul.f32 %v665, 3.0
    %v716 = vmul.f32 %v668, 3.0
    %v717 = vmul.f32 %v709, 3.0
    %v718 = vmul.f32 %v712, 3.0
    %v719 = vtanh.pop %v715
    %v720 = vtanh.pop %v716
    %v721 = vtanh.pop %v717
    %v722 = vtanh.pop %v718
    %v723 = vmax.f32 %v719, 0.0
    %v724 = vmax.f32 %v720, 0.0
    %v725 = vmax.f32 %v721, 0.0
    %v726 = vmax.f32 %v722, 0.0
    %v727 = vpack.c.bf16 %v724, %v723
    %v728 = vpack.c.bf16 %v726, %v725
    %v730 = vsel %vm165, %v727, 0
    %732 = vmatprep.subr.bf16.mxu0 0
    %733 = vmatpush1.bf16.msra.mxu0 %v163
    %734 = vmatprep.subr.bf16.mxu0 0
    %735 = vmatpush1.bf16.msra.mxu0 0
    %736 = vmatprep.subr.bf16.mxu0 0
    %737 = vmatpush1.bf16.msra.mxu0 0
    %738 = vmatprep.subr.bf16.mxu0 0
    %739 = vmatpush1.bf16.msra.mxu0 0
    %740 = vmatprep.subr.bf16.mxu0 0
    %741 = vmatpush1.bf16.msra.mxu0 0
    %742 = vmatprep.subr.bf16.mxu0 0
    %743 = vmatpush1.bf16.msra.mxu0 0
    %744 = vmatprep.subr.bf16.mxu0 0
    %745 = vmatpush1.bf16.msra.mxu0 0
    %746 = vmatprep.subr.bf16.mxu0 0
    %747 = vmatpush1.bf16.msra.mxu0 0
    %748 = vmatprep.subr.bf16.mxu0 0
    %749 = vmatpush1.bf16.msra.mxu0 0
    %750 = vmatprep.subr.bf16.mxu0 0
    %751 = vmatpush1.bf16.msra.mxu0 0
    %752 = vmatprep.subr.bf16.mxu0 0
    %753 = vmatpush1.bf16.msra.mxu0 0
    %754 = vmatprep.subr.bf16.mxu0 0
    %755 = vmatpush1.bf16.msra.mxu0 0
    %756 = vmatprep.subr.bf16.mxu0 0
    %757 = vmatpush1.bf16.msra.mxu0 0
    %758 = vmatprep.subr.bf16.mxu0 0
    %759 = vmatpush1.bf16.msra.mxu0 0
    %760 = vmatprep.subr.bf16.mxu0 0
    %761 = vmatpush1.bf16.msra.mxu0 0
    %762 = vmatprep.subr.bf16.mxu0 0
    %763 = vmatpush1.bf16.msra.mxu0 0
    %764 = vmatprep.mubr.bf16.mxu0 0
    %765 = vmatmul.mubr.bf16.gmra.mrb[0].mxu0 %v730
    %v766 = vpop.f32.mrb[0].mxu0
    %v767 = vadd.f32 0.0, %v766
    %v768 = vpop.f32.mrb[0].mxu0
    %v769 = vpop.f32.mrb[0].mxu0
    %v770 = vadd.f32 0.0, %v769
    %v771 = vpop.f32.mrb[0].mxu0
    %772 = vdwg.mxu0
    %v774 = vsel %vm165, %v728, 0
    %776 = vmatprep.subr.bf16.mxu0 0
    %777 = vmatpush1.bf16.msra.mxu0 %v214
    %778 = vmatprep.subr.bf16.mxu0 0
    %779 = vmatpush1.bf16.msra.mxu0 0
    %780 = vmatprep.subr.bf16.mxu0 0
    %781 = vmatpush1.bf16.msra.mxu0 0
    %782 = vmatprep.subr.bf16.mxu0 0
    %783 = vmatpush1.bf16.msra.mxu0 0
    %784 = vmatprep.subr.bf16.mxu0 0
    %785 = vmatpush1.bf16.msra.mxu0 0
    %786 = vmatprep.subr.bf16.mxu0 0
    %787 = vmatpush1.bf16.msra.mxu0 0
    %788 = vmatprep.subr.bf16.mxu0 0
    %789 = vmatpush1.bf16.msra.mxu0 0
    %790 = vmatprep.subr.bf16.mxu0 0
    %791 = vmatpush1.bf16.msra.mxu0 0
    %792 = vmatprep.subr.bf16.mxu0 0
    %793 = vmatpush1.bf16.msra.mxu0 0
    %794 = vmatprep.subr.bf16.mxu0 0
    %795 = vmatpush1.bf16.msra.mxu0 0
    %796 = vmatprep.subr.bf16.mxu0 0
    %797 = vmatpush1.bf16.msra.mxu0 0
    %798 = vmatprep.subr.bf16.mxu0 0
    %799 = vmatpush1.bf16.msra.mxu0 0
    %800 = vmatprep.subr.bf16.mxu0 0
    %801 = vmatpush1.bf16.msra.mxu0 0
    %802 = vmatprep.subr.bf16.mxu0 0
    %803 = vmatpush1.bf16.msra.mxu0 0
    %804 = vmatprep.subr.bf16.mxu0 0
    %805 = vmatpush1.bf16.msra.mxu0 0
    %806 = vmatprep.subr.bf16.mxu0 0
    %807 = vmatpush1.bf16.msra.mxu0 0
    %808 = vmatprep.mubr.bf16.mxu0 0
    %809 = vmatmul.mubr.bf16.gmra.mrb[0].mxu0 %v774
    %v810 = vpop.f32.mrb[0].mxu0
    %v811 = vadd.f32 0.0, %v810
    %v812 = vpop.f32.mrb[0].mxu0
    %v813 = vpop.f32.mrb[0].mxu0
    %v814 = vadd.f32 0.0, %v813
    %v815 = vpop.f32.mrb[0].mxu0
    %816 = vdwg.mxu0
    %v817 = vpack.c.bf16 %v770, %v767
    %v818 = vpack.c.bf16 %v814, %v811
    %v819 = vld [vmem:[%s15] sm:$0xf]
    %v821 = vsel %vm357, %v817, 0
    %v824 = vsel %vm357, %v818, 0
    %v827 = vsel %vm364, %v819, 0
    %829 = vmatprep.subr.bf16.mxu0 0
    %830 = vmatpush1.bf16.msra.mxu0 %v827
    %831 = vmatprep.subr.bf16.mxu0 0
    %832 = vmatpush1.bf16.msra.mxu0 0
    %833 = vmatprep.subr.bf16.mxu0 0
    %834 = vmatpush1.bf16.msra.mxu0 0
    %835 = vmatprep.subr.bf16.mxu0 0
    %836 = vmatpush1.bf16.msra.mxu0 0
    %837 = vmatprep.subr.bf16.mxu0 0
    %838 = vmatpush1.bf16.msra.mxu0 0
    %839 = vmatprep.subr.bf16.mxu0 0
    %840 = vmatpush1.bf16.msra.mxu0 0
    %841 = vmatprep.subr.bf16.mxu0 0
    %842 = vmatpush1.bf16.msra.mxu0 0
    %843 = vmatprep.subr.bf16.mxu0 0
    %844 = vmatpush1.bf16.msra.mxu0 0
    %845 = vmatprep.subr.bf16.mxu0 0
    %846 = vmatpush1.bf16.msra.mxu0 0
    %847 = vmatprep.subr.bf16.mxu0 0
    %848 = vmatpush1.bf16.msra.mxu0 0
    %849 = vmatprep.subr.bf16.mxu0 0
    %850 = vmatpush1.bf16.msra.mxu0 0
    %851 = vmatprep.subr.bf16.mxu0 0
    %852 = vmatpush1.bf16.msra.mxu0 0
    %853 = vmatprep.subr.bf16.mxu0 0
    %854 = vmatpush1.bf16.msra.mxu0 0
    %855 = vmatprep.subr.bf16.mxu0 0
    %856 = vmatpush1.bf16.msra.mxu0 0
    %857 = vmatprep.subr.bf16.mxu0 0
    %858 = vmatpush1.bf16.msra.mxu0 0
    %859 = vmatprep.subr.bf16.mxu0 0
    %860 = vmatpush1.bf16.msra.mxu0 0
    %861 = vmatprep.mubr.bf16.mxu0 0
    %862 = vmatmul.mubr.bf16.gmra.mrb[0].mxu0 %v821
    %v863 = vpop.f32.mrb[0].mxu0
    %v864 = vadd.f32 0.0, %v863
    %v865 = vpop.f32.mrb[0].mxu0
    %v866 = vpop.f32.mrb[0].mxu0
    %v867 = vadd.f32 0.0, %v866
    %v868 = vpop.f32.mrb[0].mxu0
    %869 = vmatprep.mubr.bf16.mxu0 0
    %870 = vmatmul.mubr.bf16.gmra.mrb[0].mxu0 %v824
    %v871 = vpop.f32.mrb[0].mxu0
    %v872 = vadd.f32 0.0, %v871
    %v873 = vpop.f32.mrb[0].mxu0
    %v874 = vpop.f32.mrb[0].mxu0
    %v875 = vadd.f32 0.0, %v874
    %v876 = vpop.f32.mrb[0].mxu0
    %877 = vdwg.mxu0
    %v878 = vpack.c.bf16 %v303, %v300
    %v879 = vpack.c.bf16 %v344, %v341
    %882 = vrot.lane.b32.xlu0 %v878, 8
    %v883 = vpop.permute.xlu0 %882
    %884 = vrot.lane.b32.xlu0 %v879, 8
    %v885 = vpop.permute.xlu0 %884
    %v888 = vsel %vm357, %v163, %v883
    %v891 = vsel %vm357, %v214, %v885
    %v892 = vld [vmem:[#allocation8] sm:$0xf]
    %v893 = vld [vmem:[#allocation8 + $0x4] sm:$0xf]
    %v896 = vunpack.c.l.b16 %v892
    %v897 = vunpack.c.l.b16 %v893
    %v898 = vpack.c.b16 %v897, %v896
    %v900 = vsel %vm165, %v888, 0
    %v902 = vsel %vm165, %v891, 0
    %904 = vmatprep.subr.bf16.mxu0 0
    %905 = vmatpush1.bf16.msra.mxu0 %v898
    %906 = vmatprep.subr.bf16.mxu0 0
    %907 = vmatpush1.bf16.msra.mxu0 0
    %908 = vmatprep.subr.bf16.mxu0 0
    %909 = vmatpush1.bf16.msra.mxu0 0
    %910 = vmatprep.subr.bf16.mxu0 0
    %911 = vmatpush1.bf16.msra.mxu0 0
    %912 = vmatprep.subr.bf16.mxu0 0
    %913 = vmatpush1.bf16.msra.mxu0 0
    %914 = vmatprep.subr.bf16.mxu0 0
    %915 = vmatpush1.bf16.msra.mxu0 0
    %916 = vmatprep.subr.bf16.mxu0 0
    %917 = vmatpush1.bf16.msra.mxu0 0
    %918 = vmatprep.subr.bf16.mxu0 0
    %919 = vmatpush1.bf16.msra.mxu0 0
    %920 = vmatprep.subr.bf16.mxu0 0
    %921 = vmatpush1.bf16.msra.mxu0 0
    %922 = vmatprep.subr.bf16.mxu0 0
    %923 = vmatpush1.bf16.msra.mxu0 0
    %924 = vmatprep.subr.bf16.mxu0 0
    %925 = vmatpush1.bf16.msra.mxu0 0
    %926 = vmatprep.subr.bf16.mxu0 0
    %927 = vmatpush1.bf16.msra.mxu0 0
    %928 = vmatprep.subr.bf16.mxu0 0
    %929 = vmatpush1.bf16.msra.mxu0 0
    %930 = vmatprep.subr.bf16.mxu0 0
    %931 = vmatpush1.bf16.msra.mxu0 0
    %932 = vmatprep.subr.bf16.mxu0 0
    %933 = vmatpush1.bf16.msra.mxu0 0
    %934 = vmatprep.subr.bf16.mxu0 0
    %935 = vmatpush1.bf16.msra.mxu0 0
    %936 = vmatprep.mubr.bf16.mxu0 0
    %937 = vmatmul.mubr.bf16.gmra.mrb[0].mxu0 %v900
    %v938 = vpop.f32.mrb[0].mxu0
    %v939 = vadd.f32 0.0, %v938
    %v940 = vpop.f32.mrb[0].mxu0
    %v941 = vpop.f32.mrb[0].mxu0
    %v942 = vadd.f32 0.0, %v941
    %v943 = vpop.f32.mrb[0].mxu0
    %944 = vmatprep.mubr.bf16.mxu0 0
    %945 = vmatmul.mubr.bf16.gmra.mrb[0].mxu0 %v902
    %v946 = vpop.f32.mrb[0].mxu0
    %v947 = vadd.f32 0.0, %v946
    %v948 = vpop.f32.mrb[0].mxu0
    %v949 = vpop.f32.mrb[0].mxu0
    %v950 = vadd.f32 0.0, %v949
    %v951 = vpop.f32.mrb[0].mxu0
    %952 = vdwg.mxu0
    %v953 = vld [vmem:[%s6] sm:$0xff]
    %v954 = vld [vmem:[%s6 + $0x8] sm:$0xff]
    %v955 = vmul.f32 %v939, %v953
    %v956 = vmul.f32 %v942, %v954
    %v957 = vmul.f32 %v947, %v953
    %v958 = vmul.f32 %v950, %v954
    %959 = vrot.lane.b32.xlu0 %v955, 64
    %v960 = vpop.permute.xlu0 %959
    %961 = vrot.lane.b32.xlu0 %v956, 64
    %v962 = vpop.permute.xlu0 %961
    %963 = vrot.lane.b32.xlu0 %v957, 64
    %v964 = vpop.permute.xlu0 %963
    %965 = vrot.lane.b32.xlu0 %v958, 64
    %v966 = vpop.permute.xlu0 %965
    %v967 = vadd.f32 %v955, %v960
    %v968 = vadd.f32 %v956, %v962
    %v969 = vadd.f32 %v957, %v964
    %v970 = vadd.f32 %v958, %v966
    %971 = vrot.lane.b32.xlu0 %v967, 32
    %v972 = vpop.permute.xlu0 %971
    %973 = vrot.lane.b32.xlu0 %v968, 32
    %v974 = vpop.permute.xlu0 %973
    %975 = vrot.lane.b32.xlu0 %v969, 32
    %v976 = vpop.permute.xlu0 %975
    %977 = vrot.lane.b32.xlu0 %v970, 32
    %v978 = vpop.permute.xlu0 %977
    %v979 = vadd.f32 %v967, %v972
    %v980 = vadd.f32 %v968, %v974
    %v981 = vadd.f32 %v969, %v976
    %v982 = vadd.f32 %v970, %v978
    %983 = vrot.lane.b32.xlu0 %v979, 16
    %v984 = vpop.permute.xlu0 %983
    %985 = vrot.lane.b32.xlu0 %v980, 16
    %v986 = vpop.permute.xlu0 %985
    %987 = vrot.lane.b32.xlu0 %v981, 16
    %v988 = vpop.permute.xlu0 %987
    %989 = vrot.lane.b32.xlu0 %v982, 16
    %v990 = vpop.permute.xlu0 %989
    %v991 = vadd.f32 %v979, %v984
    %v992 = vadd.f32 %v980, %v986
    %v993 = vadd.f32 %v981, %v988
    %v994 = vadd.f32 %v982, %v990
    %995 = vrot.lane.b32.xlu0 %v991, 8
    %v996 = vpop.permute.xlu0 %995
    %997 = vrot.lane.b32.xlu0 %v992, 8
    %v998 = vpop.permute.xlu0 %997
    %999 = vrot.lane.b32.xlu0 %v993, 8
    %v1000 = vpop.permute.xlu0 %999
    %1001 = vrot.lane.b32.xlu0 %v994, 8
    %v1002 = vpop.permute.xlu0 %1001
    %v1003 = vadd.f32 %v991, %v996
    %v1004 = vadd.f32 %v992, %v998
    %v1005 = vadd.f32 %v993, %v1000
    %v1006 = vadd.f32 %v994, %v1002
    %v1007 = vld [vmem:[%s7] sm:$0xff]
    %v1008 = vld [vmem:[%s7 + $0x8] sm:$0xff]
    %v1009 = vadd.f32 %v1003, %v1007
    %v1010 = vadd.f32 %v1004, %v1008
    %v1011 = vadd.f32 %v1005, %v1007
    %v1012 = vadd.f32 %v1006, %v1008
    %s1013 = sld [smem:[#allocation11]]
    %s1014 = sld [smem:[#allocation11 + $0x1]]
    %v1015 = vstv %s1013
    %v1016 = vmul.f32 %v1015, %v1009
    %v1017 = vmul.f32 %v1015, %v1010
    %v1018 = vmul.f32 %v1015, %v1011
    %v1019 = vmul.f32 %v1015, %v1012
    %v1020 = vstv %s1014
    %v1021 = vmul.f32 %v1020, %v864
    %v1022 = vmul.f32 %v1020, %v867
    %v1023 = vmul.f32 %v1020, %v872
    %v1024 = vmul.f32 %v1020, %v875
    %v1025 = vadd.f32 %v1016, %v1021
    %v1026 = vadd.f32 %v1017, %v1022
    %v1027 = vadd.f32 %v1018, %v1023
    %v1028 = vadd.f32 %v1019, %v1024
    %1029 = vst.msk [vmem:[%s17] sm:$0xff] %vm357, %v1025
    %1030 = vst.msk [vmem:[%s17 + $0x8] sm:$0xff] %vm357, %v1026
    %1031 = vst.msk [vmem:[%s17 + $0x10] sm:$0xff] %vm357, %v1027
    %1032 = vst.msk [vmem:[%s17 + $0x18] sm:$0xff] %vm357, %v1028
    // Predicated region
    $region94: #{tpu_custom_call.1} parent=1 // pred_check
      _
    $region95: #{tpu_custom_call.1} parent=1 // pred_check_branch
      %1034 = sbr.rel (0) target = $region97
    $region96: #{tpu_custom_call.1} parent=1 // pred_region
      _
    $region97: #{tpu_custom_call.1} parent=1 // pred_fallthru
      _
    // Predicated region
    $region98: #{tpu_custom_call.1} parent=1 // pred_check
      _
    $region99: #{tpu_custom_call.1} parent=1 // pred_check_branch
      %1036 = sbr.rel (0) target = $region101
    $region100: #{tpu_custom_call.1} parent=1 // pred_region
      _
    $region101: #{tpu_custom_call.1} parent=1 // pred_fallthru
      _
    %1037 = vsyncpa [#allocation3], 1
    %1038 = vsyncpa [#allocation6], 1
    %1039 = vsyncpa [#allocation9], 1
    %1040 = vsyncpa [#allocation4], 1

</llo_original>
